<compile_context>
chip_gen: v5e
topology: v5e:2x2
jax: 0.10.0
libtpu: 0.0.40
codegen_flags: <defaults>
</compile_context>

<pallas_src>
import jax
import jax.numpy as jnp
from jax.experimental import pallas as pl
from jax.experimental.pallas import tpu as pltpu

HIDDEN = 768          # BERT pooler output size
FC1 = 512             # fc1 out features
NUM_CLASSES = 2       # fc2 out features (real)
PAD_CLASSES = 128     # class axis padded to one full lane register
_NEG_PAD = -1e30      # pad-lane bias: exp(pad - max) underflows to exactly 0 in f32
_SUBLANE = 16         # bf16 LHS sublane packing -> batch padded to a multiple of 16
_MAX_TILE_B = 1024    # per-tile working set ~ a few MiB; fits every chip's VMEM


def prepare_head_params(w1, b1, w2, b2):
    """One-time parameter prep; call at init, NOT per forward.

    w1: (768, 512), b1: (512,), w2: (512, 2), b2: (2,)  — weights stored
    pre-transposed as (in_features, out_features) so the kernel computes
    x @ W + b directly.
    """
    w1b = w1.astype(jnp.bfloat16)
    b1r = b1.reshape(1, FC1).astype(jnp.float32)
    w2p = jnp.zeros((FC1, PAD_CLASSES), jnp.bfloat16).at[:, :NUM_CLASSES].set(
        w2.astype(jnp.bfloat16))
    b2p = jnp.full((1, PAD_CLASSES), _NEG_PAD, jnp.float32).at[0, :NUM_CLASSES].set(
        b2.astype(jnp.float32))
    return w1b, b1r, w2p, b2p


def _head_kernel(x_ref, w1_ref, b1_ref, w2_ref, b2_ref, out_ref):
    """fc1 -> ReLU -> (dropout: identity in eval) -> fc2 -> LogSoftmax(dim=1).

    x_ref:   (tile_b, 768)  bf16
    w1_ref:  (768, 512)     bf16   (resident across tiles)
    b1_ref:  (1, 512)       f32
    w2_ref:  (512, 128)     bf16   (columns >= 2 are zero)
    b2_ref:  (1, 128)       f32    (columns >= 2 are -1e30)
    out_ref: (tile_b, 128)  f32    (lane-dense; caller slices [:, :2])
    """
    # fc1 on the MXU with bf16 operands, f32 accumulation.
    h = jnp.dot(x_ref[...], w1_ref[...],
                preferred_element_type=jnp.float32) + b1_ref[...]
    # ReLU in f32 on the VPU (v5e has no bf16 VPU path).
    h = jnp.maximum(h, 0.0)
    # Dropout(p=0.1): identity at inference time (model.eval()).

    # fc2, padded to a full 128-lane class axis (lane-dense output).
    logits = jnp.dot(h.astype(jnp.bfloat16), w2_ref[...],
                     preferred_element_type=jnp.float32) + b2_ref[...]

    # LogSoftmax over the class axis.  Pad lanes carry a -1e30 bias, so they
    # never win the max and their exp() contributes exactly 0 to the sum.
    m = jnp.max(logits, axis=1, keepdims=True)
    shifted = logits - m
    lse = jnp.log(jnp.sum(jnp.exp(shifted), axis=1, keepdims=True))
    out_ref[...] = shifted - lse


def _round_up(n, m):
    return ((n + m - 1) // m) * m


def _choose_tiling(batch):
    """Adaptive batch tiling.

    Pads only to the bf16 sublane multiple (16); small batches run as a single
    tile (grid-step overhead dominates), larger batches get >=2 balanced tiles
    of <=1024 rows so v7x's two TensorCores are both used.
    """
    bp = _round_up(batch, _SUBLANE)
    if bp <= 256:
        return bp, 1
    num_tiles = max(2, pl.cdiv(bp, _MAX_TILE_B))
    tile_b = _round_up(pl.cdiv(bp, num_tiles), _SUBLANE)
    return tile_b, num_tiles


def bert_head_forward(cls_hs, params):
    """cls_hs: (B, 768) float; params from prepare_head_params.

    Returns (B, 2) log-probabilities (LogSoftmax over dim=1).
    """
    w1b, b1r, w2p, b2p = params
    B = cls_hs.shape[0]

    tile_b, num_tiles = _choose_tiling(B)
    Bp = tile_b * num_tiles

    # Single producer op: bf16 cast fused with the (tiny, sublane-only) pad.
    # TODO(synk): have the upstream BERT pooler emit bf16 to drop this cast.
    x = cls_hs.astype(jnp.bfloat16)
    if Bp != B:
        x = jnp.pad(x, ((0, Bp - B), (0, 0)))

    flops = 2 * Bp * (HIDDEN * FC1 + FC1 * PAD_CLASSES)
    bytes_accessed = (Bp * HIDDEN * 2                    # x (bf16)
                      + w1b.size * 2 + b1r.size * 4      # fc1 params
                      + w2p.size * 2 + b2p.size * 4      # fc2 params (padded)
                      + Bp * PAD_CLASSES * 4)            # lane-dense f32 output

    out = pl.pallas_call(
        _head_kernel,
        out_shape=jax.ShapeDtypeStruct((Bp, PAD_CLASSES), jnp.float32),
        grid=(num_tiles,),
        in_specs=[
            pl.BlockSpec((tile_b, HIDDEN), lambda i: (i, 0)),      # x batch tile (bf16)
            # Constant-index specs -> weights stay resident across batch tiles.
            # (Single-buffering them via pipeline_mode is a ~1 MiB VMEM saving;
            #  only worth revisiting if tile_b is pushed past 2048.)
            pl.BlockSpec((HIDDEN, FC1), lambda i: (0, 0)),         # w1
            pl.BlockSpec((1, FC1), lambda i: (0, 0)),              # b1
            pl.BlockSpec((FC1, PAD_CLASSES), lambda i: (0, 0)),    # w2 (padded)
            pl.BlockSpec((1, PAD_CLASSES), lambda i: (0, 0)),      # b2 (padded)
        ],
        out_specs=pl.BlockSpec((tile_b, PAD_CLASSES), lambda i: (i, 0)),
        compiler_params=pltpu.CompilerParams(
            dimension_semantics=("parallel",)),
        cost_estimate=pl.CostEstimate(
            flops=flops,
            transcendentals=Bp * (PAD_CLASSES + 1),
            bytes_accessed=bytes_accessed),
    )(x, w1b, b1r, w2p, b2p)

    return out[:B, :NUM_CLASSES]


def _reference(cls_hs, w1, b1, w2, b2):
    # Same bf16-operand / f32-accumulation numerics as the kernel.
    h = jnp.dot(cls_hs.astype(jnp.bfloat16), w1.astype(jnp.bfloat16),
                preferred_element_type=jnp.float32) + b1
    h = jnp.maximum(h, 0.0)
    logits = jnp.dot(h.astype(jnp.bfloat16), w2.astype(jnp.bfloat16),
                     preferred_element_type=jnp.float32) + b2
    return jax.nn.log_softmax(logits, axis=1)


if __name__ == "__main__":
    key = jax.random.PRNGKey(0)
    k_x, k_w1, k_b1, k_w2, k_b2 = jax.random.split(key, 5)

    B = 8  # small batch of pooled [CLS] vectors

    # Deterministic synthetic "pooler_output" and head parameters.
    cls_hs = jax.random.normal(k_x, (B, HIDDEN), dtype=jnp.float32)

    # nn.Linear-style init ranges (uniform +/- 1/sqrt(fan_in)); weights stored
    # as (in_features, out_features) so the kernel computes x @ W + b directly.
    lim1 = 1.0 / jnp.sqrt(HIDDEN)
    w1 = jax.random.uniform(k_w1, (HIDDEN, FC1), jnp.float32, -lim1, lim1)
    b1 = jax.random.uniform(k_b1, (FC1,), jnp.float32, -lim1, lim1)

    lim2 = 1.0 / jnp.sqrt(FC1)
    w2 = jax.random.uniform(k_w2, (FC1, NUM_CLASSES), jnp.float32, -lim2, lim2)
    b2 = jax.random.uniform(k_b2, (NUM_CLASSES,), jnp.float32, -lim2, lim2)

    # One-time parameter prep (kept out of the per-call path).
    params = prepare_head_params(w1, b1, w2, b2)
    params = jax.block_until_ready(params)

    out = bert_head_forward(cls_hs, params)
    out = jax.block_until_ready(out)

    ref = _reference(cls_hs, w1, b1, w2, b2)
    assert out.shape == (B, NUM_CLASSES)
    assert jnp.allclose(out, ref, atol=2e-3, rtol=2e-3), "mismatch vs reference"

    print("KERNEL_OK")
</pallas_src>

<mosaic_0001>
module attributes {stable_mosaic.version = 11 : i64} {
  func.func @_head_kernel(%arg0: i32, %arg1: memref<16x768xbf16, #tpu.memory_space<vmem>>, %arg2: memref<768x512xbf16, #tpu.memory_space<vmem>>, %arg3: memref<1x512xf32, #tpu.memory_space<vmem>>, %arg4: memref<512x128xbf16, #tpu.memory_space<vmem>>, %arg5: memref<1x128xf32, #tpu.memory_space<vmem>>, %arg6: memref<16x128xf32, #tpu.memory_space<vmem>>) attributes {dimension_semantics = [#tpu.dimension_semantics<parallel>], iteration_bounds = array<i64: 1>, scalar_prefetch = 0 : i64, scratch_operands = 0 : i64, tpu.core_type = #tpu.core_type<tc>, window_params = [{transform_indices = @transform_0, window_bounds = array<i64: 16, 768>}, {pipeline_mode = #tpu.pipeline_mode<synchronous>, transform_indices = @transform_1, window_bounds = array<i64: 768, 512>}, {pipeline_mode = #tpu.pipeline_mode<synchronous>, transform_indices = @transform_2, window_bounds = array<i64: 1, 512>}, {pipeline_mode = #tpu.pipeline_mode<synchronous>, transform_indices = @transform_3, window_bounds = array<i64: 512, 128>}, {pipeline_mode = #tpu.pipeline_mode<synchronous>, transform_indices = @transform_4, window_bounds = array<i64: 1, 128>}, {transform_indices = @transform_5, window_bounds = array<i64: 16, 128>}]} {
    %c0 = arith.constant 0 : index
    %c0_0 = arith.constant 0 : index
    %0 = vector.load %arg1[%c0, %c0_0] : memref<16x768xbf16, #tpu.memory_space<vmem>>, vector<16x768xbf16>
    %c0_1 = arith.constant 0 : index
    %c0_2 = arith.constant 0 : index
    %1 = vector.load %arg2[%c0_1, %c0_2] : memref<768x512xbf16, #tpu.memory_space<vmem>>, vector<768x512xbf16>
    %cst = arith.constant dense<0.000000e+00> : vector<16x512xf32>
    %2 = tpu.matmul %0, %1, %cst {dimension_numbers = #tpu.dot_dimension_numbers<[1], [0], [0], [1], [0, 0, 1, 1], [], []>} : vector<16x768xbf16>, vector<768x512xbf16>, vector<16x512xf32> -> vector<16x512xf32>
    %c0_3 = arith.constant 0 : index
    %c0_4 = arith.constant 0 : index
    %3 = vector.load %arg3[%c0_3, %c0_4] : memref<1x512xf32, #tpu.memory_space<vmem>>, vector<1x512xf32>
    %4 = vector.broadcast %3 : vector<1x512xf32> to vector<16x512xf32>
    %5 = arith.addf %2, %4 : vector<16x512xf32>
    %cst_5 = arith.constant 0.000000e+00 : f32
    %6 = vector.broadcast %cst_5 : f32 to vector<16x512xf32>
    %7 = arith.maximumf %5, %6 : vector<16x512xf32>
    %8 = arith.truncf %7 : vector<16x512xf32> to vector<16x512xbf16>
    %c0_6 = arith.constant 0 : index
    %c0_7 = arith.constant 0 : index
    %9 = vector.load %arg4[%c0_6, %c0_7] : memref<512x128xbf16, #tpu.memory_space<vmem>>, vector<512x128xbf16>
    %cst_8 = arith.constant dense<0.000000e+00> : vector<16x128xf32>
    %10 = tpu.matmul %8, %9, %cst_8 {dimension_numbers = #tpu.dot_dimension_numbers<[1], [0], [0], [1], [0, 0, 1, 1], [], []>} : vector<16x512xbf16>, vector<512x128xbf16>, vector<16x128xf32> -> vector<16x128xf32>
    %c0_9 = arith.constant 0 : index
    %c0_10 = arith.constant 0 : index
    %11 = vector.load %arg5[%c0_9, %c0_10] : memref<1x128xf32, #tpu.memory_space<vmem>>, vector<1x128xf32>
    %12 = vector.broadcast %11 : vector<1x128xf32> to vector<16x128xf32>
    %13 = arith.addf %10, %12 : vector<16x128xf32>
    %cst_11 = arith.constant dense<0xFF800000> : vector<16xf32>
    %14 = vector.multi_reduction <maximumf>, %13, %cst_11 [1] : vector<16x128xf32> to vector<16xf32>
    %15 = vector.shape_cast %14 : vector<16xf32> to vector<16x1xf32>
    %16 = vector.broadcast %15 : vector<16x1xf32> to vector<16x128xf32>
    %17 = arith.subf %13, %16 : vector<16x128xf32>
    %18 = math.exp %17 : vector<16x128xf32>
    %cst_12 = arith.constant dense<0.000000e+00> : vector<16xf32>
    %19 = vector.multi_reduction <add>, %18, %cst_12 [1] : vector<16x128xf32> to vector<16xf32>
    %20 = vector.shape_cast %19 : vector<16xf32> to vector<16x1xf32>
    %21 = math.log %20 : vector<16x1xf32>
    %22 = vector.broadcast %21 : vector<16x1xf32> to vector<16x128xf32>
    %23 = arith.subf %17, %22 : vector<16x128xf32>
    %c0_13 = arith.constant 0 : index
    %c0_14 = arith.constant 0 : index
    %24 = vector.load %arg6[%c0_13, %c0_14] : memref<16x128xf32, #tpu.memory_space<vmem>>, vector<16x128xf32>
    tpu.vector_store %arg6[%c0_13, %c0_14], %23 {strides = array<i32>} : memref<16x128xf32, #tpu.memory_space<vmem>>, vector<16x128xf32>,
    return
  }
  func.func @transform_0(%arg0: i32) -> (i32, i32) {
    %c0_i32 = arith.constant 0 : i32
    %c0_i32_0 = arith.constant 0 : i32
    return %arg0, %c0_i32 : i32, i32
  }
  func.func @transform_1(%arg0: i32) -> (i32, i32) {
    %c0_i32 = arith.constant 0 : i32
    %c0_i32_0 = arith.constant 0 : i32
    %c0_i32_1 = arith.constant 0 : i32
    return %c0_i32, %c0_i32_0 : i32, i32
  }
  func.func @transform_2(%arg0: i32) -> (i32, i32) {
    %c0_i32 = arith.constant 0 : i32
    %c0_i32_0 = arith.constant 0 : i32
    %c0_i32_1 = arith.constant 0 : i32
    return %c0_i32, %c0_i32_0 : i32, i32
  }
  func.func @transform_3(%arg0: i32) -> (i32, i32) {
    %c0_i32 = arith.constant 0 : i32
    %c0_i32_0 = arith.constant 0 : i32
    %c0_i32_1 = arith.constant 0 : i32
    return %c0_i32, %c0_i32_0 : i32, i32
  }
  func.func @transform_4(%arg0: i32) -> (i32, i32) {
    %c0_i32 = arith.constant 0 : i32
    %c0_i32_0 = arith.constant 0 : i32
    %c0_i32_1 = arith.constant 0 : i32
    return %c0_i32, %c0_i32_0 : i32, i32
  }
  func.func @transform_5(%arg0: i32) -> (i32, i32) {
    %c0_i32 = arith.constant 0 : i32
    %c0_i32_0 = arith.constant 0 : i32
    return %arg0, %c0_i32 : i32, i32
  }
}

</mosaic_0001>

<llo_original>
// kernel: tpu_custom_call.1
$region0: #{tpu_custom_call.1}
  #allocation0 [shape = 'u32[]', space=smem, size = 0x4, offset = 0x4, fixed_abs, tag = 'smem constant byte address 0x4 - core index']
  #allocation1 [shape = 'u32[72,128]{1,0:T(1,128)}', space=vmem, size = 0x9000, scoped, tag = 'internal scratch']
  %s0 = inlined_call_operand.hbm [shape: bf16[16,768], index: 0, kind: input, shape index: {}]
  %s1 = inlined_call_operand.hbm [shape: bf16[768,512], index: 1, kind: input, shape index: {}]
  %s2 = inlined_call_operand.hbm [shape: f32[1,512], index: 2, kind: input, shape index: {}]
  %s3 = inlined_call_operand.hbm [shape: bf16[512,128], index: 3, kind: input, shape index: {}]
  %s4 = inlined_call_operand.vmem [shape: f32[1,128], index: 4, kind: input, shape index: {}]
  %s5 = inlined_call_operand.hbm [shape: f32[16,128], index: 5, kind: output, shape index: {}]
  %s6 = sld [smem:[#allocation0]]
  $region46: #{tpu_custom_call.1} parent=0
    _
  %s8 = ssub.s32 1, %s6
  %s9 = scalar_select 0, %s8, %s6
  $region1: #{tpu_custom_call.1} parent=0
    #allocation2 [shape = 'u8[24576]{0}', space=vmem, size = 0x6000, scoped, tag = 'input window, operand 0, single buffered']
    #allocation3 [shape = 's32[1]{0}', space=sflag, size = 0x4, scoped, tag = 'scoped memory for tpu_custom_call.1']
    #allocation4 [shape = 's32[1]{0}', space=sflag, size = 0x4, scoped, tag = 'scoped memory for tpu_custom_call.1']
    #allocation5 [shape = 'u8[786432]{0}', space=vmem, size = 0xc0000, scoped, tag = 'input window, operand 1, single buffered']
    #allocation6 [shape = 's32[1]{0}', space=sflag, size = 0x4, scoped, tag = 'scoped memory for tpu_custom_call.1']
    #allocation7 [shape = 'u8[2048]{0}', space=vmem, size = 0x800, scoped, tag = 'input window, operand 2, single buffered']
    #allocation8 [shape = 'u8[131072]{0}', space=vmem, size = 0x20000, scoped, tag = 'input window, operand 3, single buffered']
    #allocation9 [shape = 's32[1]{0}', space=sflag, size = 0x4, scoped, tag = 'scoped memory for tpu_custom_call.1']
    #allocation10 [shape = 'u8[8192]{0}', space=vmem, size = 0x2000, scoped, tag = 'output window, operand 0, single buffered']
    %10 = vsyncpa [#allocation3], 0
    %11 = vsyncpa [#allocation6], 0
    %12 = vsyncpa [#allocation9], 0
    %13 = vsyncpa [#allocation4], 0
    // Predicated region
    $region2: #{tpu_custom_call.1} parent=1 // pred_check
      _
    $region3: #{tpu_custom_call.1} parent=1 // pred_check_branch
      %15 = sbr.rel (0) target = $region5
    $region4: #{tpu_custom_call.1} parent=1 // pred_region
      %17 = vsyncadd [#allocation3], 0
      %s18 = sshll.u32 %s0, 4
      %s19 = int_to_ptr.hbm [resolvable:$true] %s18
      %s20 = sshll.u32 [#allocation2], 4
      %s21 = int_to_ptr.vmem [resolvable:$true] %s20
      %26 = dma.hbm_to_vmem [thread:$0]  %s19, 768, %s21, [#allocation3], 384, 384, 24
    $region5: #{tpu_custom_call.1} parent=1 // pred_fallthru
      _
    // Predicated region
    $region6: #{tpu_custom_call.1} parent=1 // pred_check
      _
    $region7: #{tpu_custom_call.1} parent=1 // pred_check_branch
      %28 = sbr.rel (0) target = $region9
    $region8: #{tpu_custom_call.1} parent=1 // pred_region
      %30 = vsyncadd [#allocation6], 0
      %s31 = sshll.u32 %s1, 4
      %s32 = int_to_ptr.hbm [resolvable:$true] %s31
      %s33 = sshll.u32 [#allocation5], 4
      %s34 = int_to_ptr.vmem [resolvable:$true] %s33
      %39 = dma.hbm_to_vmem [thread:$0]  %s32, 24576, %s34, [#allocation6], 256, 256, 16
    $region9: #{tpu_custom_call.1} parent=1 // pred_fallthru
      _
    // Predicated region
    $region10: #{tpu_custom_call.1} parent=1 // pred_check
      _
    $region11: #{tpu_custom_call.1} parent=1 // pred_check_branch
      %41 = sbr.rel (0) target = $region13
    $region12: #{tpu_custom_call.1} parent=1 // pred_region
      %43 = vsyncadd [#allocation6], 0
      %s45 = sshll.u32 %s2, 4
      %s46 = int_to_ptr.hbm [resolvable:$true] %s45
      %s47 = sshll.u32 [#allocation7], 4
      %s48 = int_to_ptr.vmem [resolvable:$true] %s47
      %50 = dma.hbm_to_vmem [thread:$0]  %s46, 64, %s48, [#allocation6]
    $region13: #{tpu_custom_call.1} parent=1 // pred_fallthru
      _
    // Predicated region
    $region14: #{tpu_custom_call.1} parent=1 // pred_check
      _
    $region15: #{tpu_custom_call.1} parent=1 // pred_check_branch
      %52 = sbr.rel (0) target = $region17
    $region16: #{tpu_custom_call.1} parent=1 // pred_region
      %54 = vsyncadd [#allocation9], 0
      %s55 = sshll.u32 %s3, 4
      %s56 = int_to_ptr.hbm [resolvable:$true] %s55
      %s57 = sshll.u32 [#allocation8], 4
      %s58 = int_to_ptr.vmem [resolvable:$true] %s57
      %63 = dma.hbm_to_vmem [thread:$0]  %s56, 4096, %s58, [#allocation9], 64, 64, 4
    $region17: #{tpu_custom_call.1} parent=1 // pred_fallthru
      _
    // Predicated region
    $region18: #{tpu_custom_call.1} parent=1 // pred_check
      _
    $region19: #{tpu_custom_call.1} parent=1 // pred_check_branch
      %65 = sbr.rel (0) target = $region21
    $region20: #{tpu_custom_call.1} parent=1 // pred_region
      _
    $region21: #{tpu_custom_call.1} parent=1 // pred_fallthru
      _
    // Predicated region
    $region22: #{tpu_custom_call.1} parent=1 // pred_check
      _
    $region23: #{tpu_custom_call.1} parent=1 // pred_check_branch
      %67 = sbr.rel (0) target = $region25
    $region24: #{tpu_custom_call.1} parent=1 // pred_region
      %69 = dma.done [#allocation3], 768
    $region25: #{tpu_custom_call.1} parent=1 // pred_fallthru
      _
    // Predicated region
    $region26: #{tpu_custom_call.1} parent=1 // pred_check
      _
    $region27: #{tpu_custom_call.1} parent=1 // pred_check_branch
      %71 = sbr.rel (0) target = $region29
    $region28: #{tpu_custom_call.1} parent=1 // pred_region
      %73 = dma.done [#allocation6], 24576
    $region29: #{tpu_custom_call.1} parent=1 // pred_fallthru
      _
    // Predicated region
    $region30: #{tpu_custom_call.1} parent=1 // pred_check
      _
    $region31: #{tpu_custom_call.1} parent=1 // pred_check_branch
      %75 = sbr.rel (0) target = $region33
    $region32: #{tpu_custom_call.1} parent=1 // pred_region
      %77 = dma.done [#allocation6], 64
    $region33: #{tpu_custom_call.1} parent=1 // pred_fallthru
      _
    // Predicated region
    $region34: #{tpu_custom_call.1} parent=1 // pred_check
      _
    $region35: #{tpu_custom_call.1} parent=1 // pred_check_branch
      %79 = sbr.rel (0) target = $region37
    $region36: #{tpu_custom_call.1} parent=1 // pred_region
      %81 = dma.done [#allocation9], 4096
    $region37: #{tpu_custom_call.1} parent=1 // pred_fallthru
      _
    %v82 = vld [vmem:[#allocation2] sm:$0xff]
    %v83 = vld [vmem:[#allocation2 + $0x8] sm:$0xff]
    %v84 = vld [vmem:[#allocation2 + $0x10] sm:$0xff]
    %v85 = vld [vmem:[#allocation2 + $0x18] sm:$0xff]
    %v86 = vld [vmem:[#allocation2 + $0x20] sm:$0xff]
    %v87 = vld [vmem:[#allocation2 + $0x28] sm:$0xff]
    %v88 = vld [vmem:[#allocation5] sm:$0xff]
    %v89 = vld [vmem:[#allocation5 + $0x8] sm:$0xff]
    %v90 = vld [vmem:[#allocation5 + $0x10] sm:$0xff]
    %v91 = vld [vmem:[#allocation5 + $0x18] sm:$0xff]
    %v92 = vld [vmem:[#allocation5 + $0x20] sm:$0xff]
    %v93 = vld [vmem:[#allocation5 + $0x28] sm:$0xff]
    %v94 = vld [vmem:[#allocation5 + $0x30] sm:$0xff]
    %v95 = vld [vmem:[#allocation5 + $0x38] sm:$0xff]
    %v96 = vld [vmem:[#allocation5 + $0x40] sm:$0xff]
    %v97 = vld [vmem:[#allocation5 + $0x48] sm:$0xff]
    %v98 = vld [vmem:[#allocation5 + $0x50] sm:$0xff]
    %v99 = vld [vmem:[#allocation5 + $0x58] sm:$0xff]
    %v100 = vld [vmem:[#allocation5 + $0x60] sm:$0xff]
    %v101 = vld [vmem:[#allocation5 + $0x68] sm:$0xff]
    %v102 = vld [vmem:[#allocation5 + $0x70] sm:$0xff]
    %v103 = vld [vmem:[#allocation5 + $0x78] sm:$0xff]
    %v104 = vld [vmem:[#allocation5 + $0x80] sm:$0xff]
    %v105 = vld [vmem:[#allocation5 + $0x88] sm:$0xff]
    %v106 = vld [vmem:[#allocation5 + $0x90] sm:$0xff]
    %v107 = vld [vmem:[#allocation5 + $0x98] sm:$0xff]
    %v108 = vld [vmem:[#allocation5 + $0xa0] sm:$0xff]
    %v109 = vld [vmem:[#allocation5 + $0xa8] sm:$0xff]
    %v110 = vld [vmem:[#allocation5 + $0xb0] sm:$0xff]
    %v111 = vld [vmem:[#allocation5 + $0xb8] sm:$0xff]
    %v112 = vld [vmem:[#allocation5 + $0xc0] sm:$0xff]
    %v113 = vld [vmem:[#allocation5 + $0xc8] sm:$0xff]
    %v114 = vld [vmem:[#allocation5 + $0xd0] sm:$0xff]
    %v115 = vld [vmem:[#allocation5 + $0xd8] sm:$0xff]
    %v116 = vld [vmem:[#allocation5 + $0xe0] sm:$0xff]
    %v117 = vld [vmem:[#allocation5 + $0xe8] sm:$0xff]
    %v118 = vld [vmem:[#allocation5 + $0xf0] sm:$0xff]
    %v119 = vld [vmem:[#allocation5 + $0xf8] sm:$0xff]
    %v120 = vld [vmem:[#allocation5 + $0x100] sm:$0xff]
    %v121 = vld [vmem:[#allocation5 + $0x108] sm:$0xff]
    %v122 = vld [vmem:[#allocation5 + $0x110] sm:$0xff]
    %v123 = vld [vmem:[#allocation5 + $0x118] sm:$0xff]
    %v124 = vld [vmem:[#allocation5 + $0x120] sm:$0xff]
    %v125 = vld [vmem:[#allocation5 + $0x128] sm:$0xff]
    %v126 = vld [vmem:[#allocation5 + $0x130] sm:$0xff]
    %v127 = vld [vmem:[#allocation5 + $0x138] sm:$0xff]
    %v128 = vld [vmem:[#allocation5 + $0x140] sm:$0xff]
    %v129 = vld [vmem:[#allocation5 + $0x148] sm:$0xff]
    %v130 = vld [vmem:[#allocation5 + $0x150] sm:$0xff]
    %v131 = vld [vmem:[#allocation5 + $0x158] sm:$0xff]
    %v132 = vld [vmem:[#allocation5 + $0x160] sm:$0xff]
    %v133 = vld [vmem:[#allocation5 + $0x168] sm:$0xff]
    %v134 = vld [vmem:[#allocation5 + $0x170] sm:$0xff]
    %v135 = vld [vmem:[#allocation5 + $0x178] sm:$0xff]
    %v136 = vld [vmem:[#allocation5 + $0x180] sm:$0xff]
    %v137 = vld [vmem:[#allocation5 + $0x188] sm:$0xff]
    %v138 = vld [vmem:[#allocation5 + $0x190] sm:$0xff]
    %v139 = vld [vmem:[#allocation5 + $0x198] sm:$0xff]
    %v140 = vld [vmem:[#allocation5 + $0x1a0] sm:$0xff]
    %v141 = vld [vmem:[#allocation5 + $0x1a8] sm:$0xff]
    %v142 = vld [vmem:[#allocation5 + $0x1b0] sm:$0xff]
    %v143 = vld [vmem:[#allocation5 + $0x1b8] sm:$0xff]
    %v144 = vld [vmem:[#allocation5 + $0x1c0] sm:$0xff]
    %v145 = vld [vmem:[#allocation5 + $0x1c8] sm:$0xff]
    %v146 = vld [vmem:[#allocation5 + $0x1d0] sm:$0xff]
    %v147 = vld [vmem:[#allocation5 + $0x1d8] sm:$0xff]
    %v148 = vld [vmem:[#allocation5 + $0x1e0] sm:$0xff]
    %v149 = vld [vmem:[#allocation5 + $0x1e8] sm:$0xff]
    %v150 = vld [vmem:[#allocation5 + $0x1f0] sm:$0xff]
    %v151 = vld [vmem:[#allocation5 + $0x1f8] sm:$0xff]
    %v152 = vld [vmem:[#allocation5 + $0x200] sm:$0xff]
    %v153 = vld [vmem:[#allocation5 + $0x208] sm:$0xff]
    %v154 = vld [vmem:[#allocation5 + $0x210] sm:$0xff]
    %v155 = vld [vmem:[#allocation5 + $0x218] sm:$0xff]
    %v156 = vld [vmem:[#allocation5 + $0x220] sm:$0xff]
    %v157 = vld [vmem:[#allocation5 + $0x228] sm:$0xff]
    %v158 = vld [vmem:[#allocation5 + $0x230] sm:$0xff]
    %v159 = vld [vmem:[#allocation5 + $0x238] sm:$0xff]
    %v160 = vld [vmem:[#allocation5 + $0x240] sm:$0xff]
    %v161 = vld [vmem:[#allocation5 + $0x248] sm:$0xff]
    %v162 = vld [vmem:[#allocation5 + $0x250] sm:$0xff]
    %v163 = vld [vmem:[#allocation5 + $0x258] sm:$0xff]
    %v164 = vld [vmem:[#allocation5 + $0x260] sm:$0xff]
    %v165 = vld [vmem:[#allocation5 + $0x268] sm:$0xff]
    %v166 = vld [vmem:[#allocation5 + $0x270] sm:$0xff]
    %v167 = vld [vmem:[#allocation5 + $0x278] sm:$0xff]
    %v168 = vld [vmem:[#allocation5 + $0x280] sm:$0xff]
    %v169 = vld [vmem:[#allocation5 + $0x288] sm:$0xff]
    %v170 = vld [vmem:[#allocation5 + $0x290] sm:$0xff]
    %v171 = vld [vmem:[#allocation5 + $0x298] sm:$0xff]
    %v172 = vld [vmem:[#allocation5 + $0x2a0] sm:$0xff]
    %v173 = vld [vmem:[#allocation5 + $0x2a8] sm:$0xff]
    %v174 = vld [vmem:[#allocation5 + $0x2b0] sm:$0xff]
    %v175 = vld [vmem:[#allocation5 + $0x2b8] sm:$0xff]
    %v176 = vld [vmem:[#allocation5 + $0x2c0] sm:$0xff]
    %v177 = vld [vmem:[#allocation5 + $0x2c8] sm:$0xff]
    %v178 = vld [vmem:[#allocation5 + $0x2d0] sm:$0xff]
    %v179 = vld [vmem:[#allocation5 + $0x2d8] sm:$0xff]
    %v180 = vld [vmem:[#allocation5 + $0x2e0] sm:$0xff]
    %v181 = vld [vmem:[#allocation5 + $0x2e8] sm:$0xff]
    %v182 = vld [vmem:[#allocation5 + $0x2f0] sm:$0xff]
    %v183 = vld [vmem:[#allocation5 + $0x2f8] sm:$0xff]
    %v184 = vld [vmem:[#allocation5 + $0x300] sm:$0xff]
    %v185 = vld [vmem:[#allocation5 + $0x308] sm:$0xff]
    %v186 = vld [vmem:[#allocation5 + $0x310] sm:$0xff]
    %v187 = vld [vmem:[#allocation5 + $0x318] sm:$0xff]
    %v188 = vld [vmem:[#allocation5 + $0x320] sm:$0xff]
    %v189 = vld [vmem:[#allocation5 + $0x328] sm:$0xff]
    %v190 = vld [vmem:[#allocation5 + $0x330] sm:$0xff]
    %v191 = vld [vmem:[#allocation5 + $0x338] sm:$0xff]
    %v192 = vld [vmem:[#allocation5 + $0x340] sm:$0xff]
    %v193 = vld [vmem:[#allocation5 + $0x348] sm:$0xff]
    %v194 = vld [vmem:[#allocation5 + $0x350] sm:$0xff]
    %v195 = vld [vmem:[#allocation5 + $0x358] sm:$0xff]
    %v196 = vld [vmem:[#allocation5 + $0x360] sm:$0xff]
    %v197 = vld [vmem:[#allocation5 + $0x368] sm:$0xff]
    %v198 = vld [vmem:[#allocation5 + $0x370] sm:$0xff]
    %v199 = vld [vmem:[#allocation5 + $0x378] sm:$0xff]
    %v200 = vld [vmem:[#allocation5 + $0x380] sm:$0xff]
    %v201 = vld [vmem:[#allocation5 + $0x388] sm:$0xff]
    %v202 = vld [vmem:[#allocation5 + $0x390] sm:$0xff]
    %v203 = vld [vmem:[#allocation5 + $0x398] sm:$0xff]
    %v204 = vld [vmem:[#allocation5 + $0x3a0] sm:$0xff]
    %v205 = vld [vmem:[#allocation5 + $0x3a8] sm:$0xff]
    %v206 = vld [vmem:[#allocation5 + $0x3b0] sm:$0xff]
    %v207 = vld [vmem:[#allocation5 + $0x3b8] sm:$0xff]
    %v208 = vld [vmem:[#allocation5 + $0x3c0] sm:$0xff]
    %v209 = vld [vmem:[#allocation5 + $0x3c8] sm:$0xff]
    %v210 = vld [vmem:[#allocation5 + $0x3d0] sm:$0xff]
    %v211 = vld [vmem:[#allocation5 + $0x3d8] sm:$0xff]
    %v212 = vld [vmem:[#allocation5 + $0x3e0] sm:$0xff]
    %v213 = vld [vmem:[#allocation5 + $0x3e8] sm:$0xff]
    %v214 = vld [vmem:[#allocation5 + $0x3f0] sm:$0xff]
    %v215 = vld [vmem:[#allocation5 + $0x3f8] sm:$0xff]
    %v216 = vld [vmem:[#allocation5 + $0x400] sm:$0xff]
    %v217 = vld [vmem:[#allocation5 + $0x408] sm:$0xff]
    %v218 = vld [vmem:[#allocation5 + $0x410] sm:$0xff]
    %v219 = vld [vmem:[#allocation5 + $0x418] sm:$0xff]
    %v220 = vld [vmem:[#allocation5 + $0x420] sm:$0xff]
    %v221 = vld [vmem:[#allocation5 + $0x428] sm:$0xff]
    %v222 = vld [vmem:[#allocation5 + $0x430] sm:$0xff]
    %v223 = vld [vmem:[#allocation5 + $0x438] sm:$0xff]
    %v224 = vld [vmem:[#allocation5 + $0x440] sm:$0xff]
    %v225 = vld [vmem:[#allocation5 + $0x448] sm:$0xff]
    %v226 = vld [vmem:[#allocation5 + $0x450] sm:$0xff]
    %v227 = vld [vmem:[#allocation5 + $0x458] sm:$0xff]
    %v228 = vld [vmem:[#allocation5 + $0x460] sm:$0xff]
    %v229 = vld [vmem:[#allocation5 + $0x468] sm:$0xff]
    %v230 = vld [vmem:[#allocation5 + $0x470] sm:$0xff]
    %v231 = vld [vmem:[#allocation5 + $0x478] sm:$0xff]
    %v232 = vld [vmem:[#allocation5 + $0x480] sm:$0xff]
    %v233 = vld [vmem:[#allocation5 + $0x488] sm:$0xff]
    %v234 = vld [vmem:[#allocation5 + $0x490] sm:$0xff]
    %v235 = vld [vmem:[#allocation5 + $0x498] sm:$0xff]
    %v236 = vld [vmem:[#allocation5 + $0x4a0] sm:$0xff]
    %v237 = vld [vmem:[#allocation5 + $0x4a8] sm:$0xff]
    %v238 = vld [vmem:[#allocation5 + $0x4b0] sm:$0xff]
    %v239 = vld [vmem:[#allocation5 + $0x4b8] sm:$0xff]
    %v240 = vld [vmem:[#allocation5 + $0x4c0] sm:$0xff]
    %v241 = vld [vmem:[#allocation5 + $0x4c8] sm:$0xff]
    %v242 = vld [vmem:[#allocation5 + $0x4d0] sm:$0xff]
    %v243 = vld [vmem:[#allocation5 + $0x4d8] sm:$0xff]
    %v244 = vld [vmem:[#allocation5 + $0x4e0] sm:$0xff]
    %v245 = vld [vmem:[#allocation5 + $0x4e8] sm:$0xff]
    %v246 = vld [vmem:[#allocation5 + $0x4f0] sm:$0xff]
    %v247 = vld [vmem:[#allocation5 + $0x4f8] sm:$0xff]
    %v248 = vld [vmem:[#allocation5 + $0x500] sm:$0xff]
    %v249 = vld [vmem:[#allocation5 + $0x508] sm:$0xff]
    %v250 = vld [vmem:[#allocation5 + $0x510] sm:$0xff]
    %v251 = vld [vmem:[#allocation5 + $0x518] sm:$0xff]
    %v252 = vld [vmem:[#allocation5 + $0x520] sm:$0xff]
    %v253 = vld [vmem:[#allocation5 + $0x528] sm:$0xff]
    %v254 = vld [vmem:[#allocation5 + $0x530] sm:$0xff]
    %v255 = vld [vmem:[#allocation5 + $0x538] sm:$0xff]
    %v256 = vld [vmem:[#allocation5 + $0x540] sm:$0xff]
    %v257 = vld [vmem:[#allocation5 + $0x548] sm:$0xff]
    %v258 = vld [vmem:[#allocation5 + $0x550] sm:$0xff]
    %v259 = vld [vmem:[#allocation5 + $0x558] sm:$0xff]
    %v260 = vld [vmem:[#allocation5 + $0x560] sm:$0xff]
    %v261 = vld [vmem:[#allocation5 + $0x568] sm:$0xff]
    %v262 = vld [vmem:[#allocation5 + $0x570] sm:$0xff]
    %v263 = vld [vmem:[#allocation5 + $0x578] sm:$0xff]
    %v264 = vld [vmem:[#allocation5 + $0x580] sm:$0xff]
    %v265 = vld [vmem:[#allocation5 + $0x588] sm:$0xff]
    %v266 = vld [vmem:[#allocation5 + $0x590] sm:$0xff]
    %v267 = vld [vmem:[#allocation5 + $0x598] sm:$0xff]
    %v268 = vld [vmem:[#allocation5 + $0x5a0] sm:$0xff]
    %v269 = vld [vmem:[#allocation5 + $0x5a8] sm:$0xff]
    %v270 = vld [vmem:[#allocation5 + $0x5b0] sm:$0xff]
    %v271 = vld [vmem:[#allocation5 + $0x5b8] sm:$0xff]
    %v272 = vld [vmem:[#allocation5 + $0x5c0] sm:$0xff]
    %v273 = vld [vmem:[#allocation5 + $0x5c8] sm:$0xff]
    %v274 = vld [vmem:[#allocation5 + $0x5d0] sm:$0xff]
    %v275 = vld [vmem:[#allocation5 + $0x5d8] sm:$0xff]
    %v276 = vld [vmem:[#allocation5 + $0x5e0] sm:$0xff]
    %v277 = vld [vmem:[#allocation5 + $0x5e8] sm:$0xff]
    %v278 = vld [vmem:[#allocation5 + $0x5f0] sm:$0xff]
    %v279 = vld [vmem:[#allocation5 + $0x5f8] sm:$0xff]
    %v280 = vld [vmem:[#allocation7] sm:$0xf]
    %v282 = vperm.slane %v280, 0
    %v283 = vperm.slane %v280, 1
    %v284 = vperm.slane %v280, 2
    %v285 = vperm.slane %v280, 3
    %v296 = vunpack.c.l.b16 %v82
    %v297 = vunpack.c.h.b16 %v82
    %v298 = vunpack.c.l.b16 %v83
    %v299 = vunpack.c.h.b16 %v83
    %v300 = vunpack.c.l.b16 %v84
    %v301 = vunpack.c.h.b16 %v84
    %v302 = vunpack.c.l.b16 %v85
    %v303 = vunpack.c.h.b16 %v85
    %v304 = vunpack.c.l.b16 %v86
    %v305 = vunpack.c.h.b16 %v86
    %v306 = vunpack.c.l.b16 %v87
    %v307 = vunpack.c.h.b16 %v87
    %v308 = vpack.c.b16 %v302, %v296
    %v309 = vpack.c.b16 %v303, %v297
    %v310 = vpack.c.b16 %v304, %v298
    %v311 = vpack.c.b16 %v305, %v299
    %v312 = vpack.c.b16 %v306, %v300
    %v313 = vpack.c.b16 %v307, %v301
    %v512 = vunpack.c.l.b16 %v88
    %v513 = vunpack.c.h.b16 %v88
    %v514 = vunpack.c.l.b16 %v89
    %v515 = vunpack.c.h.b16 %v89
    %v516 = vunpack.c.l.b16 %v90
    %v517 = vunpack.c.h.b16 %v90
    %v518 = vunpack.c.l.b16 %v91
    %v519 = vunpack.c.h.b16 %v91
    %v520 = vunpack.c.l.b16 %v92
    %v521 = vunpack.c.h.b16 %v92
    %v522 = vunpack.c.l.b16 %v93
    %v523 = vunpack.c.h.b16 %v93
    %v524 = vunpack.c.l.b16 %v94
    %v525 = vunpack.c.h.b16 %v94
    %v526 = vunpack.c.l.b16 %v95
    %v527 = vunpack.c.h.b16 %v95
    %v528 = vunpack.c.l.b16 %v96
    %v529 = vunpack.c.h.b16 %v96
    %v530 = vunpack.c.l.b16 %v97
    %v531 = vunpack.c.h.b16 %v97
    %v532 = vunpack.c.l.b16 %v98
    %v533 = vunpack.c.h.b16 %v98
    %v534 = vunpack.c.l.b16 %v99
    %v535 = vunpack.c.h.b16 %v99
    %v536 = vunpack.c.l.b16 %v100
    %v537 = vunpack.c.h.b16 %v100
    %v538 = vunpack.c.l.b16 %v101
    %v539 = vunpack.c.h.b16 %v101
    %v540 = vunpack.c.l.b16 %v102
    %v541 = vunpack.c.h.b16 %v102
    %v542 = vunpack.c.l.b16 %v103
    %v543 = vunpack.c.h.b16 %v103
    %v544 = vunpack.c.l.b16 %v104
    %v545 = vunpack.c.h.b16 %v104
    %v546 = vunpack.c.l.b16 %v105
    %v547 = vunpack.c.h.b16 %v105
    %v548 = vunpack.c.l.b16 %v106
    %v549 = vunpack.c.h.b16 %v106
    %v550 = vunpack.c.l.b16 %v107
    %v551 = vunpack.c.h.b16 %v107
    %v552 = vunpack.c.l.b16 %v108
    %v553 = vunpack.c.h.b16 %v108
    %v554 = vunpack.c.l.b16 %v109
    %v555 = vunpack.c.h.b16 %v109
    %v556 = vunpack.c.l.b16 %v110
    %v557 = vunpack.c.h.b16 %v110
    %v558 = vunpack.c.l.b16 %v111
    %v559 = vunpack.c.h.b16 %v111
    %v560 = vunpack.c.l.b16 %v112
    %v561 = vunpack.c.h.b16 %v112
    %v562 = vunpack.c.l.b16 %v113
    %v563 = vunpack.c.h.b16 %v113
    %v564 = vunpack.c.l.b16 %v114
    %v565 = vunpack.c.h.b16 %v114
    %v566 = vunpack.c.l.b16 %v115
    %v567 = vunpack.c.h.b16 %v115
    %v568 = vunpack.c.l.b16 %v116
    %v569 = vunpack.c.h.b16 %v116
    %v570 = vunpack.c.l.b16 %v117
    %v571 = vunpack.c.h.b16 %v117
    %v572 = vunpack.c.l.b16 %v118
    %v573 = vunpack.c.h.b16 %v118
    %v574 = vunpack.c.l.b16 %v119
    %v575 = vunpack.c.h.b16 %v119
    %v576 = vunpack.c.l.b16 %v120
    %v577 = vunpack.c.h.b16 %v120
    %v578 = vunpack.c.l.b16 %v121
    %v579 = vunpack.c.h.b16 %v121
    %v580 = vunpack.c.l.b16 %v122
    %v581 = vunpack.c.h.b16 %v122
    %v582 = vunpack.c.l.b16 %v123
    %v583 = vunpack.c.h.b16 %v123
    %v584 = vunpack.c.l.b16 %v124
    %v585 = vunpack.c.h.b16 %v124
    %v586 = vunpack.c.l.b16 %v125
    %v587 = vunpack.c.h.b16 %v125
    %v588 = vunpack.c.l.b16 %v126
    %v589 = vunpack.c.h.b16 %v126
    %v590 = vunpack.c.l.b16 %v127
    %v591 = vunpack.c.h.b16 %v127
    %v592 = vunpack.c.l.b16 %v128
    %v593 = vunpack.c.h.b16 %v128
    %v594 = vunpack.c.l.b16 %v129
    %v595 = vunpack.c.h.b16 %v129
    %v596 = vunpack.c.l.b16 %v130
    %v597 = vunpack.c.h.b16 %v130
    %v598 = vunpack.c.l.b16 %v131
    %v599 = vunpack.c.h.b16 %v131
    %v600 = vunpack.c.l.b16 %v132
    %v601 = vunpack.c.h.b16 %v132
    %v602 = vunpack.c.l.b16 %v133
    %v603 = vunpack.c.h.b16 %v133
    %v604 = vunpack.c.l.b16 %v134
    %v605 = vunpack.c.h.b16 %v134
    %v606 = vunpack.c.l.b16 %v135
    %v607 = vunpack.c.h.b16 %v135
    %v608 = vunpack.c.l.b16 %v136
    %v609 = vunpack.c.h.b16 %v136
    %v610 = vunpack.c.l.b16 %v137
    %v611 = vunpack.c.h.b16 %v137
    %v612 = vunpack.c.l.b16 %v138
    %v613 = vunpack.c.h.b16 %v138
    %v614 = vunpack.c.l.b16 %v139
    %v615 = vunpack.c.h.b16 %v139
    %v616 = vunpack.c.l.b16 %v140
    %v617 = vunpack.c.h.b16 %v140
    %v618 = vunpack.c.l.b16 %v141
    %v619 = vunpack.c.h.b16 %v141
    %v620 = vunpack.c.l.b16 %v142
    %v621 = vunpack.c.h.b16 %v142
    %v622 = vunpack.c.l.b16 %v143
    %v623 = vunpack.c.h.b16 %v143
    %v624 = vunpack.c.l.b16 %v144
    %v625 = vunpack.c.h.b16 %v144
    %v626 = vunpack.c.l.b16 %v145
    %v627 = vunpack.c.h.b16 %v145
    %v628 = vunpack.c.l.b16 %v146
    %v629 = vunpack.c.h.b16 %v146
    %v630 = vunpack.c.l.b16 %v147
    %v631 = vunpack.c.h.b16 %v147
    %v632 = vunpack.c.l.b16 %v148
    %v633 = vunpack.c.h.b16 %v148
    %v634 = vunpack.c.l.b16 %v149
    %v635 = vunpack.c.h.b16 %v149
    %v636 = vunpack.c.l.b16 %v150
    %v637 = vunpack.c.h.b16 %v150
    %v638 = vunpack.c.l.b16 %v151
    %v639 = vunpack.c.h.b16 %v151
    %v640 = vunpack.c.l.b16 %v152
    %v641 = vunpack.c.h.b16 %v152
    %v642 = vunpack.c.l.b16 %v153
    %v643 = vunpack.c.h.b16 %v153
    %v644 = vunpack.c.l.b16 %v154
    %v645 = vunpack.c.h.b16 %v154
    %v646 = vunpack.c.l.b16 %v155
    %v647 = vunpack.c.h.b16 %v155
    %v648 = vunpack.c.l.b16 %v156
    %v649 = vunpack.c.h.b16 %v156
    %v650 = vunpack.c.l.b16 %v157
    %v651 = vunpack.c.h.b16 %v157
    %v652 = vunpack.c.l.b16 %v158
    %v653 = vunpack.c.h.b16 %v158
    %v654 = vunpack.c.l.b16 %v159
    %v655 = vunpack.c.h.b16 %v159
    %v656 = vunpack.c.l.b16 %v160
    %v657 = vunpack.c.h.b16 %v160
    %v658 = vunpack.c.l.b16 %v161
    %v659 = vunpack.c.h.b16 %v161
    %v660 = vunpack.c.l.b16 %v162
    %v661 = vunpack.c.h.b16 %v162
    %v662 = vunpack.c.l.b16 %v163
    %v663 = vunpack.c.h.b16 %v163
    %v664 = vunpack.c.l.b16 %v164
    %v665 = vunpack.c.h.b16 %v164
    %v666 = vunpack.c.l.b16 %v165
    %v667 = vunpack.c.h.b16 %v165
    %v668 = vunpack.c.l.b16 %v166
    %v669 = vunpack.c.h.b16 %v166
    %v670 = vunpack.c.l.b16 %v167
    %v671 = vunpack.c.h.b16 %v167
    %v672 = vunpack.c.l.b16 %v168
    %v673 = vunpack.c.h.b16 %v168
    %v674 = vunpack.c.l.b16 %v169
    %v675 = vunpack.c.h.b16 %v169
    %v676 = vunpack.c.l.b16 %v170
    %v677 = vunpack.c.h.b16 %v170
    %v678 = vunpack.c.l.b16 %v171
    %v679 = vunpack.c.h.b16 %v171
    %v680 = vunpack.c.l.b16 %v172
    %v681 = vunpack.c.h.b16 %v172
    %v682 = vunpack.c.l.b16 %v173
    %v683 = vunpack.c.h.b16 %v173
    %v684 = vunpack.c.l.b16 %v174
    %v685 = vunpack.c.h.b16 %v174
    %v686 = vunpack.c.l.b16 %v175
    %v687 = vunpack.c.h.b16 %v175
    %v688 = vunpack.c.l.b16 %v176
    %v689 = vunpack.c.h.b16 %v176
    %v690 = vunpack.c.l.b16 %v177
    %v691 = vunpack.c.h.b16 %v177
    %v692 = vunpack.c.l.b16 %v178
    %v693 = vunpack.c.h.b16 %v178
    %v694 = vunpack.c.l.b16 %v179
    %v695 = vunpack.c.h.b16 %v179
    %v696 = vunpack.c.l.b16 %v180
    %v697 = vunpack.c.h.b16 %v180
    %v698 = vunpack.c.l.b16 %v181
    %v699 = vunpack.c.h.b16 %v181
    %v700 = vunpack.c.l.b16 %v182
    %v701 = vunpack.c.h.b16 %v182
    %v702 = vunpack.c.l.b16 %v183
    %v703 = vunpack.c.h.b16 %v183
    %v704 = vunpack.c.l.b16 %v184
    %v705 = vunpack.c.h.b16 %v184
    %v706 = vunpack.c.l.b16 %v185
    %v707 = vunpack.c.h.b16 %v185
    %v708 = vunpack.c.l.b16 %v186
    %v709 = vunpack.c.h.b16 %v186
    %v710 = vunpack.c.l.b16 %v187
    %v711 = vunpack.c.h.b16 %v187
    %v712 = vunpack.c.l.b16 %v188
    %v713 = vunpack.c.h.b16 %v188
    %v714 = vunpack.c.l.b16 %v189
    %v715 = vunpack.c.h.b16 %v189
    %v716 = vunpack.c.l.b16 %v190
    %v717 = vunpack.c.h.b16 %v190
    %v718 = vunpack.c.l.b16 %v191
    %v719 = vunpack.c.h.b16 %v191
    %v720 = vunpack.c.l.b16 %v192
    %v721 = vunpack.c.h.b16 %v192
    %v722 = vunpack.c.l.b16 %v193
    %v723 = vunpack.c.h.b16 %v193
    %v724 = vunpack.c.l.b16 %v194
    %v725 = vunpack.c.h.b16 %v194
    %v726 = vunpack.c.l.b16 %v195
    %v727 = vunpack.c.h.b16 %v195
    %v728 = vunpack.c.l.b16 %v196
    %v729 = vunpack.c.h.b16 %v196
    %v730 = vunpack.c.l.b16 %v197
    %v731 = vunpack.c.h.b16 %v197
    %v732 = vunpack.c.l.b16 %v198
    %v733 = vunpack.c.h.b16 %v198
    %v734 = vunpack.c.l.b16 %v199
    %v735 = vunpack.c.h.b16 %v199
    %v736 = vunpack.c.l.b16 %v200
    %v737 = vunpack.c.h.b16 %v200
    %v738 = vunpack.c.l.b16 %v201
    %v739 = vunpack.c.h.b16 %v201
    %v740 = vunpack.c.l.b16 %v202
    %v741 = vunpack.c.h.b16 %v202
    %v742 = vunpack.c.l.b16 %v203
    %v743 = vunpack.c.h.b16 %v203
    %v744 = vunpack.c.l.b16 %v204
    %v745 = vunpack.c.h.b16 %v204
    %v746 = vunpack.c.l.b16 %v205
    %v747 = vunpack.c.h.b16 %v205
    %v748 = vunpack.c.l.b16 %v206
    %v749 = vunpack.c.h.b16 %v206
    %v750 = vunpack.c.l.b16 %v207
    %v751 = vunpack.c.h.b16 %v207
    %v752 = vunpack.c.l.b16 %v208
    %v753 = vunpack.c.h.b16 %v208
    %v754 = vunpack.c.l.b16 %v209
    %v755 = vunpack.c.h.b16 %v209
    %v756 = vunpack.c.l.b16 %v210
    %v757 = vunpack.c.h.b16 %v210
    %v758 = vunpack.c.l.b16 %v211
    %v759 = vunpack.c.h.b16 %v211
    %v760 = vunpack.c.l.b16 %v212
    %v761 = vunpack.c.h.b16 %v212
    %v762 = vunpack.c.l.b16 %v213
    %v763 = vunpack.c.h.b16 %v213
    %v764 = vunpack.c.l.b16 %v214
    %v765 = vunpack.c.h.b16 %v214
    %v766 = vunpack.c.l.b16 %v215
    %v767 = vunpack.c.h.b16 %v215
    %v768 = vunpack.c.l.b16 %v216
    %v769 = vunpack.c.h.b16 %v216
    %v770 = vunpack.c.l.b16 %v217
    %v771 = vunpack.c.h.b16 %v217
    %v772 = vunpack.c.l.b16 %v218
    %v773 = vunpack.c.h.b16 %v218
    %v774 = vunpack.c.l.b16 %v219
    %v775 = vunpack.c.h.b16 %v219
    %v776 = vunpack.c.l.b16 %v220
    %v777 = vunpack.c.h.b16 %v220
    %v778 = vunpack.c.l.b16 %v221
    %v779 = vunpack.c.h.b16 %v221
    %v780 = vunpack.c.l.b16 %v222
    %v781 = vunpack.c.h.b16 %v222
    %v782 = vunpack.c.l.b16 %v223
    %v783 = vunpack.c.h.b16 %v223
    %v784 = vunpack.c.l.b16 %v224
    %v785 = vunpack.c.h.b16 %v224
    %v786 = vunpack.c.l.b16 %v225
    %v787 = vunpack.c.h.b16 %v225
    %v788 = vunpack.c.l.b16 %v226
    %v789 = vunpack.c.h.b16 %v226
    %v790 = vunpack.c.l.b16 %v227
    %v791 = vunpack.c.h.b16 %v227
    %v792 = vunpack.c.l.b16 %v228
    %v793 = vunpack.c.h.b16 %v228
    %v794 = vunpack.c.l.b16 %v229
    %v795 = vunpack.c.h.b16 %v229
    %v796 = vunpack.c.l.b16 %v230
    %v797 = vunpack.c.h.b16 %v230
    %v798 = vunpack.c.l.b16 %v231
    %v799 = vunpack.c.h.b16 %v231
    %v800 = vunpack.c.l.b16 %v232
    %v801 = vunpack.c.h.b16 %v232
    %v802 = vunpack.c.l.b16 %v233
    %v803 = vunpack.c.h.b16 %v233
    %v804 = vunpack.c.l.b16 %v234
    %v805 = vunpack.c.h.b16 %v234
    %v806 = vunpack.c.l.b16 %v235
    %v807 = vunpack.c.h.b16 %v235
    %v808 = vunpack.c.l.b16 %v236
    %v809 = vunpack.c.h.b16 %v236
    %v810 = vunpack.c.l.b16 %v237
    %v811 = vunpack.c.h.b16 %v237
    %v812 = vunpack.c.l.b16 %v238
    %v813 = vunpack.c.h.b16 %v238
    %v814 = vunpack.c.l.b16 %v239
    %v815 = vunpack.c.h.b16 %v239
    %v816 = vunpack.c.l.b16 %v240
    %v817 = vunpack.c.h.b16 %v240
    %v818 = vunpack.c.l.b16 %v241
    %v819 = vunpack.c.h.b16 %v241
    %v820 = vunpack.c.l.b16 %v242
    %v821 = vunpack.c.h.b16 %v242
    %v822 = vunpack.c.l.b16 %v243
    %v823 = vunpack.c.h.b16 %v243
    %v824 = vunpack.c.l.b16 %v244
    %v825 = vunpack.c.h.b16 %v244
    %v826 = vunpack.c.l.b16 %v245
    %v827 = vunpack.c.h.b16 %v245
    %v828 = vunpack.c.l.b16 %v246
    %v829 = vunpack.c.h.b16 %v246
    %v830 = vunpack.c.l.b16 %v247
    %v831 = vunpack.c.h.b16 %v247
    %v832 = vunpack.c.l.b16 %v248
    %v833 = vunpack.c.h.b16 %v248
    %v834 = vunpack.c.l.b16 %v249
    %v835 = vunpack.c.h.b16 %v249
    %v836 = vunpack.c.l.b16 %v250
    %v837 = vunpack.c.h.b16 %v250
    %v838 = vunpack.c.l.b16 %v251
    %v839 = vunpack.c.h.b16 %v251
    %v840 = vunpack.c.l.b16 %v252
    %v841 = vunpack.c.h.b16 %v252
    %v842 = vunpack.c.l.b16 %v253
    %v843 = vunpack.c.h.b16 %v253
    %v844 = vunpack.c.l.b16 %v254
    %v845 = vunpack.c.h.b16 %v254
    %v846 = vunpack.c.l.b16 %v255
    %v847 = vunpack.c.h.b16 %v255
    %v848 = vunpack.c.l.b16 %v256
    %v849 = vunpack.c.h.b16 %v256
    %v850 = vunpack.c.l.b16 %v257
    %v851 = vunpack.c.h.b16 %v257
    %v852 = vunpack.c.l.b16 %v258
    %v853 = vunpack.c.h.b16 %v258
    %v854 = vunpack.c.l.b16 %v259
    %v855 = vunpack.c.h.b16 %v259
    %v856 = vunpack.c.l.b16 %v260
    %v857 = vunpack.c.h.b16 %v260
    %v858 = vunpack.c.l.b16 %v261
    %v859 = vunpack.c.h.b16 %v261
    %v860 = vunpack.c.l.b16 %v262
    %v861 = vunpack.c.h.b16 %v262
    %v862 = vunpack.c.l.b16 %v263
    %v863 = vunpack.c.h.b16 %v263
    %v864 = vunpack.c.l.b16 %v264
    %v865 = vunpack.c.h.b16 %v264
    %v866 = vunpack.c.l.b16 %v265
    %v867 = vunpack.c.h.b16 %v265
    %v868 = vunpack.c.l.b16 %v266
    %v869 = vunpack.c.h.b16 %v266
    %v870 = vunpack.c.l.b16 %v267
    %v871 = vunpack.c.h.b16 %v267
    %v872 = vunpack.c.l.b16 %v268
    %v873 = vunpack.c.h.b16 %v268
    %v874 = vunpack.c.l.b16 %v269
    %v875 = vunpack.c.h.b16 %v269
    %v876 = vunpack.c.l.b16 %v270
    %v877 = vunpack.c.h.b16 %v270
    %v878 = vunpack.c.l.b16 %v271
    %v879 = vunpack.c.h.b16 %v271
    %v880 = vunpack.c.l.b16 %v272
    %v881 = vunpack.c.h.b16 %v272
    %v882 = vunpack.c.l.b16 %v273
    %v883 = vunpack.c.h.b16 %v273
    %v884 = vunpack.c.l.b16 %v274
    %v885 = vunpack.c.h.b16 %v274
    %v886 = vunpack.c.l.b16 %v275
    %v887 = vunpack.c.h.b16 %v275
    %v888 = vunpack.c.l.b16 %v276
    %v889 = vunpack.c.h.b16 %v276
    %v890 = vunpack.c.l.b16 %v277
    %v891 = vunpack.c.h.b16 %v277
    %v892 = vunpack.c.l.b16 %v278
    %v893 = vunpack.c.h.b16 %v278
    %v894 = vunpack.c.l.b16 %v279
    %v895 = vunpack.c.h.b16 %v279
    %v896 = vpack.c.b16 %v516, %v512
    %v897 = vpack.c.b16 %v517, %v513
    %v898 = vpack.c.b16 %v518, %v514
    %v899 = vpack.c.b16 %v519, %v515
    %v900 = vpack.c.b16 %v524, %v520
    %v901 = vpack.c.b16 %v525, %v521
    %v902 = vpack.c.b16 %v526, %v522
    %v903 = vpack.c.b16 %v527, %v523
    %v904 = vpack.c.b16 %v532, %v528
    %v905 = vpack.c.b16 %v533, %v529
    %v906 = vpack.c.b16 %v534, %v530
    %v907 = vpack.c.b16 %v535, %v531
    %v908 = vpack.c.b16 %v540, %v536
    %v909 = vpack.c.b16 %v541, %v537
    %v910 = vpack.c.b16 %v542, %v538
    %v911 = vpack.c.b16 %v543, %v539
    %v912 = vpack.c.b16 %v548, %v544
    %v913 = vpack.c.b16 %v549, %v545
    %v914 = vpack.c.b16 %v550, %v546
    %v915 = vpack.c.b16 %v551, %v547
    %v916 = vpack.c.b16 %v556, %v552
    %v917 = vpack.c.b16 %v557, %v553
    %v918 = vpack.c.b16 %v558, %v554
    %v919 = vpack.c.b16 %v559, %v555
    %v920 = vpack.c.b16 %v564, %v560
    %v921 = vpack.c.b16 %v565, %v561
    %v922 = vpack.c.b16 %v566, %v562
    %v923 = vpack.c.b16 %v567, %v563
    %v924 = vpack.c.b16 %v572, %v568
    %v925 = vpack.c.b16 %v573, %v569
    %v926 = vpack.c.b16 %v574, %v570
    %v927 = vpack.c.b16 %v575, %v571
    %v928 = vpack.c.b16 %v580, %v576
    %v929 = vpack.c.b16 %v581, %v577
    %v930 = vpack.c.b16 %v582, %v578
    %v931 = vpack.c.b16 %v583, %v579
    %v932 = vpack.c.b16 %v588, %v584
    %v933 = vpack.c.b16 %v589, %v585
    %v934 = vpack.c.b16 %v590, %v586
    %v935 = vpack.c.b16 %v591, %v587
    %v936 = vpack.c.b16 %v596, %v592
    %v937 = vpack.c.b16 %v597, %v593
    %v938 = vpack.c.b16 %v598, %v594
    %v939 = vpack.c.b16 %v599, %v595
    %v940 = vpack.c.b16 %v604, %v600
    %v941 = vpack.c.b16 %v605, %v601
    %v942 = vpack.c.b16 %v606, %v602
    %v943 = vpack.c.b16 %v607, %v603
    %v944 = vpack.c.b16 %v612, %v608
    %v945 = vpack.c.b16 %v613, %v609
    %v946 = vpack.c.b16 %v614, %v610
    %v947 = vpack.c.b16 %v615, %v611
    %v948 = vpack.c.b16 %v620, %v616
    %v949 = vpack.c.b16 %v621, %v617
    %v950 = vpack.c.b16 %v622, %v618
    %v951 = vpack.c.b16 %v623, %v619
    %v952 = vpack.c.b16 %v628, %v624
    %v953 = vpack.c.b16 %v629, %v625
    %v954 = vpack.c.b16 %v630, %v626
    %v955 = vpack.c.b16 %v631, %v627
    %v956 = vpack.c.b16 %v636, %v632
    %v957 = vpack.c.b16 %v637, %v633
    %v958 = vpack.c.b16 %v638, %v634
    %v959 = vpack.c.b16 %v639, %v635
    %v960 = vpack.c.b16 %v644, %v640
    %v961 = vpack.c.b16 %v645, %v641
    %v962 = vpack.c.b16 %v646, %v642
    %v963 = vpack.c.b16 %v647, %v643
    %v964 = vpack.c.b16 %v652, %v648
    %v965 = vpack.c.b16 %v653, %v649
    %v966 = vpack.c.b16 %v654, %v650
    %v967 = vpack.c.b16 %v655, %v651
    %v968 = vpack.c.b16 %v660, %v656
    %v969 = vpack.c.b16 %v661, %v657
    %v970 = vpack.c.b16 %v662, %v658
    %v971 = vpack.c.b16 %v663, %v659
    %v972 = vpack.c.b16 %v668, %v664
    %v973 = vpack.c.b16 %v669, %v665
    %v974 = vpack.c.b16 %v670, %v666
    %v975 = vpack.c.b16 %v671, %v667
    %v976 = vpack.c.b16 %v676, %v672
    %v977 = vpack.c.b16 %v677, %v673
    %v978 = vpack.c.b16 %v678, %v674
    %v979 = vpack.c.b16 %v679, %v675
    %v980 = vpack.c.b16 %v684, %v680
    %v981 = vpack.c.b16 %v685, %v681
    %v982 = vpack.c.b16 %v686, %v682
    %v983 = vpack.c.b16 %v687, %v683
    %v984 = vpack.c.b16 %v692, %v688
    %v985 = vpack.c.b16 %v693, %v689
    %v986 = vpack.c.b16 %v694, %v690
    %v987 = vpack.c.b16 %v695, %v691
    %v988 = vpack.c.b16 %v700, %v696
    %v989 = vpack.c.b16 %v701, %v697
    %v990 = vpack.c.b16 %v702, %v698
    %v991 = vpack.c.b16 %v703, %v699
    %v992 = vpack.c.b16 %v708, %v704
    %v993 = vpack.c.b16 %v709, %v705
    %v994 = vpack.c.b16 %v710, %v706
    %v995 = vpack.c.b16 %v711, %v707
    %v996 = vpack.c.b16 %v716, %v712
    %v997 = vpack.c.b16 %v717, %v713
    %v998 = vpack.c.b16 %v718, %v714
    %v999 = vpack.c.b16 %v719, %v715
    %v1000 = vpack.c.b16 %v724, %v720
    %v1001 = vpack.c.b16 %v725, %v721
    %v1002 = vpack.c.b16 %v726, %v722
    %v1003 = vpack.c.b16 %v727, %v723
    %v1004 = vpack.c.b16 %v732, %v728
    %v1005 = vpack.c.b16 %v733, %v729
    %v1006 = vpack.c.b16 %v734, %v730
    %v1007 = vpack.c.b16 %v735, %v731
    %v1008 = vpack.c.b16 %v740, %v736
    %v1009 = vpack.c.b16 %v741, %v737
    %v1010 = vpack.c.b16 %v742, %v738
    %v1011 = vpack.c.b16 %v743, %v739
    %v1012 = vpack.c.b16 %v748, %v744
    %v1013 = vpack.c.b16 %v749, %v745
    %v1014 = vpack.c.b16 %v750, %v746
    %v1015 = vpack.c.b16 %v751, %v747
    %v1016 = vpack.c.b16 %v756, %v752
    %v1017 = vpack.c.b16 %v757, %v753
    %v1018 = vpack.c.b16 %v758, %v754
    %v1019 = vpack.c.b16 %v759, %v755
    %v1020 = vpack.c.b16 %v764, %v760
    %v1021 = vpack.c.b16 %v765, %v761
    %v1022 = vpack.c.b16 %v766, %v762
    %v1023 = vpack.c.b16 %v767, %v763
    %v1024 = vpack.c.b16 %v772, %v768
    %v1025 = vpack.c.b16 %v773, %v769
    %v1026 = vpack.c.b16 %v774, %v770
    %v1027 = vpack.c.b16 %v775, %v771
    %v1028 = vpack.c.b16 %v780, %v776
    %v1029 = vpack.c.b16 %v781, %v777
    %v1030 = vpack.c.b16 %v782, %v778
    %v1031 = vpack.c.b16 %v783, %v779
    %v1032 = vpack.c.b16 %v788, %v784
    %v1033 = vpack.c.b16 %v789, %v785
    %v1034 = vpack.c.b16 %v790, %v786
    %v1035 = vpack.c.b16 %v791, %v787
    %v1036 = vpack.c.b16 %v796, %v792
    %v1037 = vpack.c.b16 %v797, %v793
    %v1038 = vpack.c.b16 %v798, %v794
    %v1039 = vpack.c.b16 %v799, %v795
    %v1040 = vpack.c.b16 %v804, %v800
    %v1041 = vpack.c.b16 %v805, %v801
    %v1042 = vpack.c.b16 %v806, %v802
    %v1043 = vpack.c.b16 %v807, %v803
    %v1044 = vpack.c.b16 %v812, %v808
    %v1045 = vpack.c.b16 %v813, %v809
    %v1046 = vpack.c.b16 %v814, %v810
    %v1047 = vpack.c.b16 %v815, %v811
    %v1048 = vpack.c.b16 %v820, %v816
    %v1049 = vpack.c.b16 %v821, %v817
    %v1050 = vpack.c.b16 %v822, %v818
    %v1051 = vpack.c.b16 %v823, %v819
    %v1052 = vpack.c.b16 %v828, %v824
    %v1053 = vpack.c.b16 %v829, %v825
    %v1054 = vpack.c.b16 %v830, %v826
    %v1055 = vpack.c.b16 %v831, %v827
    %v1056 = vpack.c.b16 %v836, %v832
    %v1057 = vpack.c.b16 %v837, %v833
    %v1058 = vpack.c.b16 %v838, %v834
    %v1059 = vpack.c.b16 %v839, %v835
    %v1060 = vpack.c.b16 %v844, %v840
    %v1061 = vpack.c.b16 %v845, %v841
    %v1062 = vpack.c.b16 %v846, %v842
    %v1063 = vpack.c.b16 %v847, %v843
    %v1064 = vpack.c.b16 %v852, %v848
    %v1065 = vpack.c.b16 %v853, %v849
    %v1066 = vpack.c.b16 %v854, %v850
    %v1067 = vpack.c.b16 %v855, %v851
    %v1068 = vpack.c.b16 %v860, %v856
    %v1069 = vpack.c.b16 %v861, %v857
    %v1070 = vpack.c.b16 %v862, %v858
    %v1071 = vpack.c.b16 %v863, %v859
    %v1072 = vpack.c.b16 %v868, %v864
    %v1073 = vpack.c.b16 %v869, %v865
    %v1074 = vpack.c.b16 %v870, %v866
    %v1075 = vpack.c.b16 %v871, %v867
    %v1076 = vpack.c.b16 %v876, %v872
    %v1077 = vpack.c.b16 %v877, %v873
    %v1078 = vpack.c.b16 %v878, %v874
    %v1079 = vpack.c.b16 %v879, %v875
    %v1080 = vpack.c.b16 %v884, %v880
    %v1081 = vpack.c.b16 %v885, %v881
    %v1082 = vpack.c.b16 %v886, %v882
    %v1083 = vpack.c.b16 %v887, %v883
    %v1084 = vpack.c.b16 %v892, %v888
    %v1085 = vpack.c.b16 %v893, %v889
    %v1086 = vpack.c.b16 %v894, %v890
    %v1087 = vpack.c.b16 %v895, %v891
    %1280 = vmatpush.bf16.msra.mxu0 %v924
    %1281 = vmatpush.bf16.msra.mxu0 %v920
    %1282 = vmatpush.bf16.msra.mxu0 %v916
    %1283 = vmatpush.bf16.msra.mxu0 %v912
    %1284 = vmatpush.bf16.msra.mxu0 %v908
    %1285 = vmatpush.bf16.msra.mxu0 %v904
    %1286 = vmatpush.bf16.msra.mxu0 %v900
    %1287 = vmatpush.bf16.msra.mxu0 %v896
    %1288 = vmatmul.bf16.gmra.mxu0 %v308
    %v1289 = vpop.f32.mrf.mxu0
    %v1290 = vadd.f32 %v282, %v1289
    %v1291 = vpop.f32.mrf.mxu0
    %v1292 = vadd.f32 %v282, %v1291
    %1293 = vdwg.mxu0
    %1294 = vmatpush.bf16.msra.mxu0 %v956
    %1295 = vmatpush.bf16.msra.mxu0 %v952
    %1296 = vmatpush.bf16.msra.mxu0 %v948
    %1297 = vmatpush.bf16.msra.mxu0 %v944
    %1298 = vmatpush.bf16.msra.mxu0 %v940
    %1299 = vmatpush.bf16.msra.mxu0 %v936
    %1300 = vmatpush.bf16.msra.mxu0 %v932
    %1301 = vmatpush.bf16.msra.mxu0 %v928
    %1302 = vmatmul.bf16.gmra.mxu0 %v309
    %v1303 = vpop.f32.mrf.mxu0
    %v1304 = vadd.f32 %v1290, %v1303
    %v1305 = vpop.f32.mrf.mxu0
    %v1306 = vadd.f32 %v1292, %v1305
    %1307 = vdwg.mxu0
    %1308 = vmatpush.bf16.msra.mxu0 %v988
    %1309 = vmatpush.bf16.msra.mxu0 %v984
    %1310 = vmatpush.bf16.msra.mxu0 %v980
    %1311 = vmatpush.bf16.msra.mxu0 %v976
    %1312 = vmatpush.bf16.msra.mxu0 %v972
    %1313 = vmatpush.bf16.msra.mxu0 %v968
    %1314 = vmatpush.bf16.msra.mxu0 %v964
    %1315 = vmatpush.bf16.msra.mxu0 %v960
    %1316 = vmatmul.bf16.gmra.mxu0 %v310
    %v1317 = vpop.f32.mrf.mxu0
    %v1318 = vadd.f32 %v1304, %v1317
    %v1319 = vpop.f32.mrf.mxu0
    %v1320 = vadd.f32 %v1306, %v1319
    %1321 = vdwg.mxu0
    %1322 = vmatpush.bf16.msra.mxu0 %v1020
    %1323 = vmatpush.bf16.msra.mxu0 %v1016
    %1324 = vmatpush.bf16.msra.mxu0 %v1012
    %1325 = vmatpush.bf16.msra.mxu0 %v1008
    %1326 = vmatpush.bf16.msra.mxu0 %v1004
    %1327 = vmatpush.bf16.msra.mxu0 %v1000
    %1328 = vmatpush.bf16.msra.mxu0 %v996
    %1329 = vmatpush.bf16.msra.mxu0 %v992
    %1330 = vmatmul.bf16.gmra.mxu0 %v311
    %v1331 = vpop.f32.mrf.mxu0
    %v1332 = vadd.f32 %v1318, %v1331
    %v1333 = vpop.f32.mrf.mxu0
    %v1334 = vadd.f32 %v1320, %v1333
    %1335 = vdwg.mxu0
    %1336 = vmatpush.bf16.msra.mxu0 %v1052
    %1337 = vmatpush.bf16.msra.mxu0 %v1048
    %1338 = vmatpush.bf16.msra.mxu0 %v1044
    %1339 = vmatpush.bf16.msra.mxu0 %v1040
    %1340 = vmatpush.bf16.msra.mxu0 %v1036
    %1341 = vmatpush.bf16.msra.mxu0 %v1032
    %1342 = vmatpush.bf16.msra.mxu0 %v1028
    %1343 = vmatpush.bf16.msra.mxu0 %v1024
    %1344 = vmatmul.bf16.gmra.mxu0 %v312
    %v1345 = vpop.f32.mrf.mxu0
    %v1346 = vadd.f32 %v1332, %v1345
    %v1347 = vpop.f32.mrf.mxu0
    %v1348 = vadd.f32 %v1334, %v1347
    %1349 = vdwg.mxu0
    %1350 = vmatpush.bf16.msra.mxu0 %v1084
    %1351 = vmatpush.bf16.msra.mxu0 %v1080
    %1352 = vmatpush.bf16.msra.mxu0 %v1076
    %1353 = vmatpush.bf16.msra.mxu0 %v1072
    %1354 = vmatpush.bf16.msra.mxu0 %v1068
    %1355 = vmatpush.bf16.msra.mxu0 %v1064
    %1356 = vmatpush.bf16.msra.mxu0 %v1060
    %1357 = vmatpush.bf16.msra.mxu0 %v1056
    %1358 = vmatmul.bf16.gmra.mxu0 %v313
    %v1359 = vpop.f32.mrf.mxu0
    %v1360 = vadd.f32 %v1346, %v1359
    %v1361 = vpop.f32.mrf.mxu0
    %v1362 = vadd.f32 %v1348, %v1361
    %1363 = vdwg.mxu0
    %1364 = vmatpush.bf16.msra.mxu0 %v925
    %1365 = vmatpush.bf16.msra.mxu0 %v921
    %1366 = vmatpush.bf16.msra.mxu0 %v917
    %1367 = vmatpush.bf16.msra.mxu0 %v913
    %1368 = vmatpush.bf16.msra.mxu0 %v909
    %1369 = vmatpush.bf16.msra.mxu0 %v905
    %1370 = vmatpush.bf16.msra.mxu0 %v901
    %1371 = vmatpush.bf16.msra.mxu0 %v897
    %1372 = vmatmul.bf16.gmra.mxu0 %v308
    %v1373 = vpop.f32.mrf.mxu0
    %v1374 = vadd.f32 %v283, %v1373
    %v1375 = vpop.f32.mrf.mxu0
    %v1376 = vadd.f32 %v283, %v1375
    %1377 = vdwg.mxu0
    %1378 = vmatpush.bf16.msra.mxu0 %v957
    %1379 = vmatpush.bf16.msra.mxu0 %v953
    %1380 = vmatpush.bf16.msra.mxu0 %v949
    %1381 = vmatpush.bf16.msra.mxu0 %v945
    %1382 = vmatpush.bf16.msra.mxu0 %v941
    %1383 = vmatpush.bf16.msra.mxu0 %v937
    %1384 = vmatpush.bf16.msra.mxu0 %v933
    %1385 = vmatpush.bf16.msra.mxu0 %v929
    %1386 = vmatmul.bf16.gmra.mxu0 %v309
    %v1387 = vpop.f32.mrf.mxu0
    %v1388 = vadd.f32 %v1374, %v1387
    %v1389 = vpop.f32.mrf.mxu0
    %v1390 = vadd.f32 %v1376, %v1389
    %1391 = vdwg.mxu0
    %1392 = vmatpush.bf16.msra.mxu0 %v989
    %1393 = vmatpush.bf16.msra.mxu0 %v985
    %1394 = vmatpush.bf16.msra.mxu0 %v981
    %1395 = vmatpush.bf16.msra.mxu0 %v977
    %1396 = vmatpush.bf16.msra.mxu0 %v973
    %1397 = vmatpush.bf16.msra.mxu0 %v969
    %1398 = vmatpush.bf16.msra.mxu0 %v965
    %1399 = vmatpush.bf16.msra.mxu0 %v961
    %1400 = vmatmul.bf16.gmra.mxu0 %v310
    %v1401 = vpop.f32.mrf.mxu0
    %v1402 = vadd.f32 %v1388, %v1401
    %v1403 = vpop.f32.mrf.mxu0
    %v1404 = vadd.f32 %v1390, %v1403
    %1405 = vdwg.mxu0
    %1406 = vmatpush.bf16.msra.mxu0 %v1021
    %1407 = vmatpush.bf16.msra.mxu0 %v1017
    %1408 = vmatpush.bf16.msra.mxu0 %v1013
    %1409 = vmatpush.bf16.msra.mxu0 %v1009
    %1410 = vmatpush.bf16.msra.mxu0 %v1005
    %1411 = vmatpush.bf16.msra.mxu0 %v1001
    %1412 = vmatpush.bf16.msra.mxu0 %v997
    %1413 = vmatpush.bf16.msra.mxu0 %v993
    %1414 = vmatmul.bf16.gmra.mxu0 %v311
    %v1415 = vpop.f32.mrf.mxu0
    %v1416 = vadd.f32 %v1402, %v1415
    %v1417 = vpop.f32.mrf.mxu0
    %v1418 = vadd.f32 %v1404, %v1417
    %1419 = vdwg.mxu0
    %1420 = vmatpush.bf16.msra.mxu0 %v1053
    %1421 = vmatpush.bf16.msra.mxu0 %v1049
    %1422 = vmatpush.bf16.msra.mxu0 %v1045
    %1423 = vmatpush.bf16.msra.mxu0 %v1041
    %1424 = vmatpush.bf16.msra.mxu0 %v1037
    %1425 = vmatpush.bf16.msra.mxu0 %v1033
    %1426 = vmatpush.bf16.msra.mxu0 %v1029
    %1427 = vmatpush.bf16.msra.mxu0 %v1025
    %1428 = vmatmul.bf16.gmra.mxu0 %v312
    %v1429 = vpop.f32.mrf.mxu0
    %v1430 = vadd.f32 %v1416, %v1429
    %v1431 = vpop.f32.mrf.mxu0
    %v1432 = vadd.f32 %v1418, %v1431
    %1433 = vdwg.mxu0
    %1434 = vmatpush.bf16.msra.mxu0 %v1085
    %1435 = vmatpush.bf16.msra.mxu0 %v1081
    %1436 = vmatpush.bf16.msra.mxu0 %v1077
    %1437 = vmatpush.bf16.msra.mxu0 %v1073
    %1438 = vmatpush.bf16.msra.mxu0 %v1069
    %1439 = vmatpush.bf16.msra.mxu0 %v1065
    %1440 = vmatpush.bf16.msra.mxu0 %v1061
    %1441 = vmatpush.bf16.msra.mxu0 %v1057
    %1442 = vmatmul.bf16.gmra.mxu0 %v313
    %v1443 = vpop.f32.mrf.mxu0
    %v1444 = vadd.f32 %v1430, %v1443
    %v1445 = vpop.f32.mrf.mxu0
    %v1446 = vadd.f32 %v1432, %v1445
    %1447 = vdwg.mxu0
    %1448 = vmatpush.bf16.msra.mxu0 %v926
    %1449 = vmatpush.bf16.msra.mxu0 %v922
    %1450 = vmatpush.bf16.msra.mxu0 %v918
    %1451 = vmatpush.bf16.msra.mxu0 %v914
    %1452 = vmatpush.bf16.msra.mxu0 %v910
    %1453 = vmatpush.bf16.msra.mxu0 %v906
    %1454 = vmatpush.bf16.msra.mxu0 %v902
    %1455 = vmatpush.bf16.msra.mxu0 %v898
    %1456 = vmatmul.bf16.gmra.mxu0 %v308
    %v1457 = vpop.f32.mrf.mxu0
    %v1458 = vadd.f32 %v284, %v1457
    %v1459 = vpop.f32.mrf.mxu0
    %v1460 = vadd.f32 %v284, %v1459
    %1461 = vdwg.mxu0
    %1462 = vmatpush.bf16.msra.mxu0 %v958
    %1463 = vmatpush.bf16.msra.mxu0 %v954
    %1464 = vmatpush.bf16.msra.mxu0 %v950
    %1465 = vmatpush.bf16.msra.mxu0 %v946
    %1466 = vmatpush.bf16.msra.mxu0 %v942
    %1467 = vmatpush.bf16.msra.mxu0 %v938
    %1468 = vmatpush.bf16.msra.mxu0 %v934
    %1469 = vmatpush.bf16.msra.mxu0 %v930
    %1470 = vmatmul.bf16.gmra.mxu0 %v309
    %v1471 = vpop.f32.mrf.mxu0
    %v1472 = vadd.f32 %v1458, %v1471
    %v1473 = vpop.f32.mrf.mxu0
    %v1474 = vadd.f32 %v1460, %v1473
    %1475 = vdwg.mxu0
    %1476 = vmatpush.bf16.msra.mxu0 %v990
    %1477 = vmatpush.bf16.msra.mxu0 %v986
    %1478 = vmatpush.bf16.msra.mxu0 %v982
    %1479 = vmatpush.bf16.msra.mxu0 %v978
    %1480 = vmatpush.bf16.msra.mxu0 %v974
    %1481 = vmatpush.bf16.msra.mxu0 %v970
    %1482 = vmatpush.bf16.msra.mxu0 %v966
    %1483 = vmatpush.bf16.msra.mxu0 %v962
    %1484 = vmatmul.bf16.gmra.mxu0 %v310
    %v1485 = vpop.f32.mrf.mxu0
    %v1486 = vadd.f32 %v1472, %v1485
    %v1487 = vpop.f32.mrf.mxu0
    %v1488 = vadd.f32 %v1474, %v1487
    %1489 = vdwg.mxu0
    %1490 = vmatpush.bf16.msra.mxu0 %v1022
    %1491 = vmatpush.bf16.msra.mxu0 %v1018
    %1492 = vmatpush.bf16.msra.mxu0 %v1014
    %1493 = vmatpush.bf16.msra.mxu0 %v1010
    %1494 = vmatpush.bf16.msra.mxu0 %v1006
    %1495 = vmatpush.bf16.msra.mxu0 %v1002
    %1496 = vmatpush.bf16.msra.mxu0 %v998
    %1497 = vmatpush.bf16.msra.mxu0 %v994
    %1498 = vmatmul.bf16.gmra.mxu0 %v311
    %v1499 = vpop.f32.mrf.mxu0
    %v1500 = vadd.f32 %v1486, %v1499
    %v1501 = vpop.f32.mrf.mxu0
    %v1502 = vadd.f32 %v1488, %v1501
    %1503 = vdwg.mxu0
    %1504 = vmatpush.bf16.msra.mxu0 %v1054
    %1505 = vmatpush.bf16.msra.mxu0 %v1050
    %1506 = vmatpush.bf16.msra.mxu0 %v1046
    %1507 = vmatpush.bf16.msra.mxu0 %v1042
    %1508 = vmatpush.bf16.msra.mxu0 %v1038
    %1509 = vmatpush.bf16.msra.mxu0 %v1034
    %1510 = vmatpush.bf16.msra.mxu0 %v1030
    %1511 = vmatpush.bf16.msra.mxu0 %v1026
    %1512 = vmatmul.bf16.gmra.mxu0 %v312
    %v1513 = vpop.f32.mrf.mxu0
    %v1514 = vadd.f32 %v1500, %v1513
    %v1515 = vpop.f32.mrf.mxu0
    %v1516 = vadd.f32 %v1502, %v1515
    %1517 = vdwg.mxu0
    %1518 = vmatpush.bf16.msra.mxu0 %v1086
    %1519 = vmatpush.bf16.msra.mxu0 %v1082
    %1520 = vmatpush.bf16.msra.mxu0 %v1078
    %1521 = vmatpush.bf16.msra.mxu0 %v1074
    %1522 = vmatpush.bf16.msra.mxu0 %v1070
    %1523 = vmatpush.bf16.msra.mxu0 %v1066
    %1524 = vmatpush.bf16.msra.mxu0 %v1062
    %1525 = vmatpush.bf16.msra.mxu0 %v1058
    %1526 = vmatmul.bf16.gmra.mxu0 %v313
    %v1527 = vpop.f32.mrf.mxu0
    %v1528 = vadd.f32 %v1514, %v1527
    %v1529 = vpop.f32.mrf.mxu0
    %v1530 = vadd.f32 %v1516, %v1529
    %1531 = vdwg.mxu0
    %1532 = vmatpush.bf16.msra.mxu0 %v927
    %1533 = vmatpush.bf16.msra.mxu0 %v923
    %1534 = vmatpush.bf16.msra.mxu0 %v919
    %1535 = vmatpush.bf16.msra.mxu0 %v915
    %1536 = vmatpush.bf16.msra.mxu0 %v911
    %1537 = vmatpush.bf16.msra.mxu0 %v907
    %1538 = vmatpush.bf16.msra.mxu0 %v903
    %1539 = vmatpush.bf16.msra.mxu0 %v899
    %1540 = vmatmul.bf16.gmra.mxu0 %v308
    %v1541 = vpop.f32.mrf.mxu0
    %v1542 = vadd.f32 %v285, %v1541
    %v1543 = vpop.f32.mrf.mxu0
    %v1544 = vadd.f32 %v285, %v1543
    %1545 = vdwg.mxu0
    %1546 = vmatpush.bf16.msra.mxu0 %v959
    %1547 = vmatpush.bf16.msra.mxu0 %v955
    %1548 = vmatpush.bf16.msra.mxu0 %v951
    %1549 = vmatpush.bf16.msra.mxu0 %v947
    %1550 = vmatpush.bf16.msra.mxu0 %v943
    %1551 = vmatpush.bf16.msra.mxu0 %v939
    %1552 = vmatpush.bf16.msra.mxu0 %v935
    %1553 = vmatpush.bf16.msra.mxu0 %v931
    %1554 = vmatmul.bf16.gmra.mxu0 %v309
    %v1555 = vpop.f32.mrf.mxu0
    %v1556 = vadd.f32 %v1542, %v1555
    %v1557 = vpop.f32.mrf.mxu0
    %v1558 = vadd.f32 %v1544, %v1557
    %1559 = vdwg.mxu0
    %1560 = vmatpush.bf16.msra.mxu0 %v991
    %1561 = vmatpush.bf16.msra.mxu0 %v987
    %1562 = vmatpush.bf16.msra.mxu0 %v983
    %1563 = vmatpush.bf16.msra.mxu0 %v979
    %1564 = vmatpush.bf16.msra.mxu0 %v975
    %1565 = vmatpush.bf16.msra.mxu0 %v971
    %1566 = vmatpush.bf16.msra.mxu0 %v967
    %1567 = vmatpush.bf16.msra.mxu0 %v963
    %1568 = vmatmul.bf16.gmra.mxu0 %v310
    %v1569 = vpop.f32.mrf.mxu0
    %v1570 = vadd.f32 %v1556, %v1569
    %v1571 = vpop.f32.mrf.mxu0
    %v1572 = vadd.f32 %v1558, %v1571
    %1573 = vdwg.mxu0
    %1574 = vmatpush.bf16.msra.mxu0 %v1023
    %1575 = vmatpush.bf16.msra.mxu0 %v1019
    %1576 = vmatpush.bf16.msra.mxu0 %v1015
    %1577 = vmatpush.bf16.msra.mxu0 %v1011
    %1578 = vmatpush.bf16.msra.mxu0 %v1007
    %1579 = vmatpush.bf16.msra.mxu0 %v1003
    %1580 = vmatpush.bf16.msra.mxu0 %v999
    %1581 = vmatpush.bf16.msra.mxu0 %v995
    %1582 = vmatmul.bf16.gmra.mxu0 %v311
    %v1583 = vpop.f32.mrf.mxu0
    %v1584 = vadd.f32 %v1570, %v1583
    %v1585 = vpop.f32.mrf.mxu0
    %v1586 = vadd.f32 %v1572, %v1585
    %1587 = vdwg.mxu0
    %1588 = vmatpush.bf16.msra.mxu0 %v1055
    %1589 = vmatpush.bf16.msra.mxu0 %v1051
    %1590 = vmatpush.bf16.msra.mxu0 %v1047
    %1591 = vmatpush.bf16.msra.mxu0 %v1043
    %1592 = vmatpush.bf16.msra.mxu0 %v1039
    %1593 = vmatpush.bf16.msra.mxu0 %v1035
    %1594 = vmatpush.bf16.msra.mxu0 %v1031
    %1595 = vmatpush.bf16.msra.mxu0 %v1027
    %1596 = vmatmul.bf16.gmra.mxu0 %v312
    %v1597 = vpop.f32.mrf.mxu0
    %v1598 = vadd.f32 %v1584, %v1597
    %v1599 = vpop.f32.mrf.mxu0
    %v1600 = vadd.f32 %v1586, %v1599
    %1601 = vdwg.mxu0
    %1602 = vmatpush.bf16.msra.mxu0 %v1087
    %1603 = vmatpush.bf16.msra.mxu0 %v1083
    %1604 = vmatpush.bf16.msra.mxu0 %v1079
    %1605 = vmatpush.bf16.msra.mxu0 %v1075
    %1606 = vmatpush.bf16.msra.mxu0 %v1071
    %1607 = vmatpush.bf16.msra.mxu0 %v1067
    %1608 = vmatpush.bf16.msra.mxu0 %v1063
    %1609 = vmatpush.bf16.msra.mxu0 %v1059
    %1610 = vmatmul.bf16.gmra.mxu0 %v313
    %v1611 = vpop.f32.mrf.mxu0
    %v1612 = vadd.f32 %v1598, %v1611
    %v1613 = vpop.f32.mrf.mxu0
    %v1614 = vadd.f32 %v1600, %v1613
    %1615 = vdwg.mxu0
    %v1616 = vmax.f32 %v1360, 0.0
    %v1617 = vmax.f32 %v1444, 0.0
    %v1618 = vmax.f32 %v1528, 0.0
    %v1619 = vmax.f32 %v1612, 0.0
    %v1620 = vmax.f32 %v1362, 0.0
    %v1621 = vmax.f32 %v1446, 0.0
    %v1622 = vmax.f32 %v1530, 0.0
    %v1623 = vmax.f32 %v1614, 0.0
    %v1624 = vpack.c.bf16 %v1620, %v1616
    %v1625 = vpack.c.bf16 %v1621, %v1617
    %v1626 = vpack.c.bf16 %v1622, %v1618
    %v1627 = vpack.c.bf16 %v1623, %v1619
    %v1628 = vld [vmem:[#allocation8] sm:$0xf]
    %v1629 = vld [vmem:[#allocation8 + $0x4] sm:$0xf]
    %v1630 = vld [vmem:[#allocation8 + $0x8] sm:$0xf]
    %v1631 = vld [vmem:[#allocation8 + $0xc] sm:$0xf]
    %v1632 = vld [vmem:[#allocation8 + $0x10] sm:$0xf]
    %v1633 = vld [vmem:[#allocation8 + $0x14] sm:$0xf]
    %v1634 = vld [vmem:[#allocation8 + $0x18] sm:$0xf]
    %v1635 = vld [vmem:[#allocation8 + $0x1c] sm:$0xf]
    %v1636 = vld [vmem:[#allocation8 + $0x20] sm:$0xf]
    %v1637 = vld [vmem:[#allocation8 + $0x24] sm:$0xf]
    %v1638 = vld [vmem:[#allocation8 + $0x28] sm:$0xf]
    %v1639 = vld [vmem:[#allocation8 + $0x2c] sm:$0xf]
    %v1640 = vld [vmem:[#allocation8 + $0x30] sm:$0xf]
    %v1641 = vld [vmem:[#allocation8 + $0x34] sm:$0xf]
    %v1642 = vld [vmem:[#allocation8 + $0x38] sm:$0xf]
    %v1643 = vld [vmem:[#allocation8 + $0x3c] sm:$0xf]
    %v1644 = vld [vmem:[#allocation8 + $0x40] sm:$0xf]
    %v1645 = vld [vmem:[#allocation8 + $0x44] sm:$0xf]
    %v1646 = vld [vmem:[#allocation8 + $0x48] sm:$0xf]
    %v1647 = vld [vmem:[#allocation8 + $0x4c] sm:$0xf]
    %v1648 = vld [vmem:[#allocation8 + $0x50] sm:$0xf]
    %v1649 = vld [vmem:[#allocation8 + $0x54] sm:$0xf]
    %v1650 = vld [vmem:[#allocation8 + $0x58] sm:$0xf]
    %v1651 = vld [vmem:[#allocation8 + $0x5c] sm:$0xf]
    %v1652 = vld [vmem:[#allocation8 + $0x60] sm:$0xf]
    %v1653 = vld [vmem:[#allocation8 + $0x64] sm:$0xf]
    %v1654 = vld [vmem:[#allocation8 + $0x68] sm:$0xf]
    %v1655 = vld [vmem:[#allocation8 + $0x6c] sm:$0xf]
    %v1656 = vld [vmem:[#allocation8 + $0x70] sm:$0xf]
    %v1657 = vld [vmem:[#allocation8 + $0x74] sm:$0xf]
    %v1658 = vld [vmem:[#allocation8 + $0x78] sm:$0xf]
    %v1659 = vld [vmem:[#allocation8 + $0x7c] sm:$0xf]
    %v1660 = vld [vmem:[#allocation8 + $0x80] sm:$0xf]
    %v1661 = vld [vmem:[#allocation8 + $0x84] sm:$0xf]
    %v1662 = vld [vmem:[#allocation8 + $0x88] sm:$0xf]
    %v1663 = vld [vmem:[#allocation8 + $0x8c] sm:$0xf]
    %v1664 = vld [vmem:[#allocation8 + $0x90] sm:$0xf]
    %v1665 = vld [vmem:[#allocation8 + $0x94] sm:$0xf]
    %v1666 = vld [vmem:[#allocation8 + $0x98] sm:$0xf]
    %v1667 = vld [vmem:[#allocation8 + $0x9c] sm:$0xf]
    %v1668 = vld [vmem:[#allocation8 + $0xa0] sm:$0xf]
    %v1669 = vld [vmem:[#allocation8 + $0xa4] sm:$0xf]
    %v1670 = vld [vmem:[#allocation8 + $0xa8] sm:$0xf]
    %v1671 = vld [vmem:[#allocation8 + $0xac] sm:$0xf]
    %v1672 = vld [vmem:[#allocation8 + $0xb0] sm:$0xf]
    %v1673 = vld [vmem:[#allocation8 + $0xb4] sm:$0xf]
    %v1674 = vld [vmem:[#allocation8 + $0xb8] sm:$0xf]
    %v1675 = vld [vmem:[#allocation8 + $0xbc] sm:$0xf]
    %v1676 = vld [vmem:[#allocation8 + $0xc0] sm:$0xf]
    %v1677 = vld [vmem:[#allocation8 + $0xc4] sm:$0xf]
    %v1678 = vld [vmem:[#allocation8 + $0xc8] sm:$0xf]
    %v1679 = vld [vmem:[#allocation8 + $0xcc] sm:$0xf]
    %v1680 = vld [vmem:[#allocation8 + $0xd0] sm:$0xf]
    %v1681 = vld [vmem:[#allocation8 + $0xd4] sm:$0xf]
    %v1682 = vld [vmem:[#allocation8 + $0xd8] sm:$0xf]
    %v1683 = vld [vmem:[#allocation8 + $0xdc] sm:$0xf]
    %v1684 = vld [vmem:[#allocation8 + $0xe0] sm:$0xf]
    %v1685 = vld [vmem:[#allocation8 + $0xe4] sm:$0xf]
    %v1686 = vld [vmem:[#allocation8 + $0xe8] sm:$0xf]
    %v1687 = vld [vmem:[#allocation8 + $0xec] sm:$0xf]
    %v1688 = vld [vmem:[#allocation8 + $0xf0] sm:$0xf]
    %v1689 = vld [vmem:[#allocation8 + $0xf4] sm:$0xf]
    %v1690 = vld [vmem:[#allocation8 + $0xf8] sm:$0xf]
    %v1691 = vld [vmem:[#allocation8 + $0xfc] sm:$0xf]
    %v1692 = vld [vmem:[%s4] sm:$0x1]
    %v1694 = vperm.slane %v1692, 0
    %v1760 = vunpack.c.l.b16 %v1628
    %v1761 = vunpack.c.l.b16 %v1629
    %v1762 = vunpack.c.l.b16 %v1630
    %v1763 = vunpack.c.l.b16 %v1631
    %v1764 = vunpack.c.l.b16 %v1632
    %v1765 = vunpack.c.l.b16 %v1633
    %v1766 = vunpack.c.l.b16 %v1634
    %v1767 = vunpack.c.l.b16 %v1635
    %v1768 = vunpack.c.l.b16 %v1636
    %v1769 = vunpack.c.l.b16 %v1637
    %v1770 = vunpack.c.l.b16 %v1638
    %v1771 = vunpack.c.l.b16 %v1639
    %v1772 = vunpack.c.l.b16 %v1640
    %v1773 = vunpack.c.l.b16 %v1641
    %v1774 = vunpack.c.l.b16 %v1642
    %v1775 = vunpack.c.l.b16 %v1643
    %v1776 = vunpack.c.l.b16 %v1644
    %v1777 = vunpack.c.l.b16 %v1645
    %v1778 = vunpack.c.l.b16 %v1646
    %v1779 = vunpack.c.l.b16 %v1647
    %v1780 = vunpack.c.l.b16 %v1648
    %v1781 = vunpack.c.l.b16 %v1649
    %v1782 = vunpack.c.l.b16 %v1650
    %v1783 = vunpack.c.l.b16 %v1651
    %v1784 = vunpack.c.l.b16 %v1652
    %v1785 = vunpack.c.l.b16 %v1653
    %v1786 = vunpack.c.l.b16 %v1654
    %v1787 = vunpack.c.l.b16 %v1655
    %v1788 = vunpack.c.l.b16 %v1656
    %v1789 = vunpack.c.l.b16 %v1657
    %v1790 = vunpack.c.l.b16 %v1658
    %v1791 = vunpack.c.l.b16 %v1659
    %v1792 = vunpack.c.l.b16 %v1660
    %v1793 = vunpack.c.l.b16 %v1661
    %v1794 = vunpack.c.l.b16 %v1662
    %v1795 = vunpack.c.l.b16 %v1663
    %v1796 = vunpack.c.l.b16 %v1664
    %v1797 = vunpack.c.l.b16 %v1665
    %v1798 = vunpack.c.l.b16 %v1666
    %v1799 = vunpack.c.l.b16 %v1667
    %v1800 = vunpack.c.l.b16 %v1668
    %v1801 = vunpack.c.l.b16 %v1669
    %v1802 = vunpack.c.l.b16 %v1670
    %v1803 = vunpack.c.l.b16 %v1671
    %v1804 = vunpack.c.l.b16 %v1672
    %v1805 = vunpack.c.l.b16 %v1673
    %v1806 = vunpack.c.l.b16 %v1674
    %v1807 = vunpack.c.l.b16 %v1675
    %v1808 = vunpack.c.l.b16 %v1676
    %v1809 = vunpack.c.l.b16 %v1677
    %v1810 = vunpack.c.l.b16 %v1678
    %v1811 = vunpack.c.l.b16 %v1679
    %v1812 = vunpack.c.l.b16 %v1680
    %v1813 = vunpack.c.l.b16 %v1681
    %v1814 = vunpack.c.l.b16 %v1682
    %v1815 = vunpack.c.l.b16 %v1683
    %v1816 = vunpack.c.l.b16 %v1684
    %v1817 = vunpack.c.l.b16 %v1685
    %v1818 = vunpack.c.l.b16 %v1686
    %v1819 = vunpack.c.l.b16 %v1687
    %v1820 = vunpack.c.l.b16 %v1688
    %v1821 = vunpack.c.l.b16 %v1689
    %v1822 = vunpack.c.l.b16 %v1690
    %v1823 = vunpack.c.l.b16 %v1691
    %v1824 = vpack.c.b16 %v1761, %v1760
    %v1825 = vpack.c.b16 %v1763, %v1762
    %v1826 = vpack.c.b16 %v1765, %v1764
    %v1827 = vpack.c.b16 %v1767, %v1766
    %v1828 = vpack.c.b16 %v1769, %v1768
    %v1829 = vpack.c.b16 %v1771, %v1770
    %v1830 = vpack.c.b16 %v1773, %v1772
    %v1831 = vpack.c.b16 %v1775, %v1774
    %v1832 = vpack.c.b16 %v1777, %v1776
    %v1833 = vpack.c.b16 %v1779, %v1778
    %v1834 = vpack.c.b16 %v1781, %v1780
    %v1835 = vpack.c.b16 %v1783, %v1782
    %v1836 = vpack.c.b16 %v1785, %v1784
    %v1837 = vpack.c.b16 %v1787, %v1786
    %v1838 = vpack.c.b16 %v1789, %v1788
    %v1839 = vpack.c.b16 %v1791, %v1790
    %v1840 = vpack.c.b16 %v1793, %v1792
    %v1841 = vpack.c.b16 %v1795, %v1794
    %v1842 = vpack.c.b16 %v1797, %v1796
    %v1843 = vpack.c.b16 %v1799, %v1798
    %v1844 = vpack.c.b16 %v1801, %v1800
    %v1845 = vpack.c.b16 %v1803, %v1802
    %v1846 = vpack.c.b16 %v1805, %v1804
    %v1847 = vpack.c.b16 %v1807, %v1806
    %v1848 = vpack.c.b16 %v1809, %v1808
    %v1849 = vpack.c.b16 %v1811, %v1810
    %v1850 = vpack.c.b16 %v1813, %v1812
    %v1851 = vpack.c.b16 %v1815, %v1814
    %v1852 = vpack.c.b16 %v1817, %v1816
    %v1853 = vpack.c.b16 %v1819, %v1818
    %v1854 = vpack.c.b16 %v1821, %v1820
    %v1855 = vpack.c.b16 %v1823, %v1822
    %1888 = vmatpush.bf16.msra.mxu0 %v1831
    %1889 = vmatpush.bf16.msra.mxu0 %v1830
    %1890 = vmatpush.bf16.msra.mxu0 %v1829
    %1891 = vmatpush.bf16.msra.mxu0 %v1828
    %1892 = vmatpush.bf16.msra.mxu0 %v1827
    %1893 = vmatpush.bf16.msra.mxu0 %v1826
    %1894 = vmatpush.bf16.msra.mxu0 %v1825
    %1895 = vmatpush.bf16.msra.mxu0 %v1824
    %1896 = vmatmul.bf16.gmra.mxu0 %v1624
    %v1897 = vpop.f32.mrf.mxu0
    %v1898 = vadd.f32 %v1694, %v1897
    %v1899 = vpop.f32.mrf.mxu0
    %v1900 = vadd.f32 %v1694, %v1899
    %1901 = vdwg.mxu0
    %1902 = vmatpush.bf16.msra.mxu0 %v1839
    %1903 = vmatpush.bf16.msra.mxu0 %v1838
    %1904 = vmatpush.bf16.msra.mxu0 %v1837
    %1905 = vmatpush.bf16.msra.mxu0 %v1836
    %1906 = vmatpush.bf16.msra.mxu0 %v1835
    %1907 = vmatpush.bf16.msra.mxu0 %v1834
    %1908 = vmatpush.bf16.msra.mxu0 %v1833
    %1909 = vmatpush.bf16.msra.mxu0 %v1832
    %1910 = vmatmul.bf16.gmra.mxu0 %v1625
    %v1911 = vpop.f32.mrf.mxu0
    %v1912 = vadd.f32 %v1898, %v1911
    %v1913 = vpop.f32.mrf.mxu0
    %v1914 = vadd.f32 %v1900, %v1913
    %1915 = vdwg.mxu0
    %1916 = vmatpush.bf16.msra.mxu0 %v1847
    %1917 = vmatpush.bf16.msra.mxu0 %v1846
    %1918 = vmatpush.bf16.msra.mxu0 %v1845
    %1919 = vmatpush.bf16.msra.mxu0 %v1844
    %1920 = vmatpush.bf16.msra.mxu0 %v1843
    %1921 = vmatpush.bf16.msra.mxu0 %v1842
    %1922 = vmatpush.bf16.msra.mxu0 %v1841
    %1923 = vmatpush.bf16.msra.mxu0 %v1840
    %1924 = vmatmul.bf16.gmra.mxu0 %v1626
    %v1925 = vpop.f32.mrf.mxu0
    %v1926 = vadd.f32 %v1912, %v1925
    %v1927 = vpop.f32.mrf.mxu0
    %v1928 = vadd.f32 %v1914, %v1927
    %1929 = vdwg.mxu0
    %1930 = vmatpush.bf16.msra.mxu0 %v1855
    %1931 = vmatpush.bf16.msra.mxu0 %v1854
    %1932 = vmatpush.bf16.msra.mxu0 %v1853
    %1933 = vmatpush.bf16.msra.mxu0 %v1852
    %1934 = vmatpush.bf16.msra.mxu0 %v1851
    %1935 = vmatpush.bf16.msra.mxu0 %v1850
    %1936 = vmatpush.bf16.msra.mxu0 %v1849
    %1937 = vmatpush.bf16.msra.mxu0 %v1848
    %1938 = vmatmul.bf16.gmra.mxu0 %v1627
    %v1939 = vpop.f32.mrf.mxu0
    %v1940 = vadd.f32 %v1926, %v1939
    %v1941 = vpop.f32.mrf.mxu0
    %v1942 = vadd.f32 %v1928, %v1941
    %1943 = vdwg.mxu0
    %1944 = vmax.xlane.f32.xlu0 %v1940
    %v1945 = vpop.xlane.xlu0 %1944
    %1946 = vmax.xlane.f32.xlu0 %v1942
    %v1947 = vpop.xlane.xlu0 %1946
    %v1948 = vsub.f32 %v1940, %v1945
    %v1949 = vsub.f32 %v1942, %v1947
    %v1950 = vmul.f32 %v1948, 1.442695
    %v1951 = vpow.pop %v1950
    %v1952 = vmul.f32 %v1949, 1.442695
    %v1953 = vpow.pop %v1952
    %1954 = vadd.xlane.f32.xlu0 %v1951
    %v1955 = vpop.xlane.xlu0 %1954
    %1956 = vadd.xlane.f32.xlu0 %v1953
    %v1957 = vpop.xlane.xlu0 %1956
    %v1958 = vlog2.pop %v1955
    %v1959 = vmul.f32 %v1958, 0.6931472
    %v1960 = vlog2.pop %v1957
    %v1961 = vmul.f32 %v1960, 0.6931472
    %v1962 = vsub.f32 %v1948, %v1959
    %v1963 = vsub.f32 %v1949, %v1961
    %1964 = vst [vmem:[#allocation10] sm:$0xff] %v1962
    %1965 = vst [vmem:[#allocation10 + $0x8] sm:$0xff] %v1963
    // Predicated region
    $region38: #{tpu_custom_call.1} parent=1 // pred_check
      _
    $region39: #{tpu_custom_call.1} parent=1 // pred_check_branch
      %1967 = sbr.rel (0) target = $region41
    $region40: #{tpu_custom_call.1} parent=1 // pred_region
      %1969 = vsyncadd [#allocation4], 0
      %s1970 = sshll.u32 [#allocation10], 4
      %s1971 = int_to_ptr.vmem [resolvable:$true] %s1970
      %s1972 = sshll.u32 %s5, 4
      %s1973 = int_to_ptr.hbm [resolvable:$true] %s1972
      %1978 = dma.vmem_to_hbm [thread:$0]  %s1971, 256, %s1973, [#allocation4], 128, 128, 8
    $region41: #{tpu_custom_call.1} parent=1 // pred_fallthru
      _
    // Predicated region
    $region42: #{tpu_custom_call.1} parent=1 // pred_check
      _
    $region43: #{tpu_custom_call.1} parent=1 // pred_check_branch
      %1980 = sbr.rel (0) target = $region45
    $region44: #{tpu_custom_call.1} parent=1 // pred_region
      %1982 = dma.done [#allocation4], 256
    $region45: #{tpu_custom_call.1} parent=1 // pred_fallthru
      _
    %1983 = vsyncpa [#allocation3], 1
    %1984 = vsyncpa [#allocation6], 1
    %1985 = vsyncpa [#allocation9], 1
    %1986 = vsyncpa [#allocation4], 1

</llo_original>
